<compile_context>
chip_gen: v7x
topology: tpu7x:2x2x1
jax: 0.10.0
libtpu: 0.0.40
codegen_flags: <defaults>
</compile_context>

<pallas_src>
import functools
import math

import jax
import jax.numpy as jnp
from jax.experimental import pallas as pl


def _sdpa_kernel(q_ref, k_ref, v_ref, w_ref, b_ref, out_ref, att_ref,
                 *, b_s, h, d_k):
    """Single invocation over the whole batch (no grid; all refs in VMEM).

    q_ref:   (b_s*h, nq, d_k)      k_ref/v_ref: (b_s*h, nk, d_k)
    w_ref:   (h, d_k, d_model)     fc_o weight, transposed & split per head
    b_ref:   (1, d_model)          fc_o bias
    out_ref: (b_s, nq, d_model)    att_ref: (b_s*h, nq, nk)  (f32 probs)
    """
    scale = 1.0 / math.sqrt(d_k)

    # Fold the softmax scale into Q (f32), then feed the MXU bf16 operands;
    # contractions accumulate in f32 via preferred_element_type.
    q = (q_ref[...] * scale).astype(jnp.bfloat16)     # (g, nq, d_k)
    k = k_ref[...].astype(jnp.bfloat16)               # (g, nk, d_k)
    v = v_ref[...].astype(jnp.bfloat16)               # (g, nk, d_k)

    # Scores: one batched matmul over g = b_s*h; K consumed untransposed
    # (contract over d_k), so no explicit XLU transpose.
    scores = jnp.einsum('gqd,gkd->gqk', q, k,
                        preferred_element_type=jnp.float32)   # (g, nq, nk) f32

    # Numerically-stable softmax over the key axis, statistics in f32.
    m = jnp.max(scores, axis=-1, keepdims=True)
    e = jnp.exp(scores - m)
    s = jnp.sum(e, axis=-1, keepdims=True)

    # Externally-returned att: exact reciprocal (no approx error leaks out).
    att_ref[...] = (e * pl.reciprocal(s)).astype(att_ref.dtype)

    # Internal PV path: EUP approximate reciprocal (free bundle slot),
    # probabilities in bf16 (values in [0,1], safe for the MXU).
    p = (e * pl.reciprocal(s, approx=True)).astype(jnp.bfloat16)

    # att @ V, batched over g.
    pv = jnp.einsum('gqk,gkd->gqd', p, v,
                    preferred_element_type=jnp.float32)        # (g, nq, d_k) f32

    # fc_o with the head-concat folded into per-head weight slabs:
    #   out[b] = sum_h pv[b,h] @ W_h + bias
    # Head reduction is one vectorized sum (no per-head scalar add loop).
    w = w_ref[...].astype(jnp.bfloat16)                        # (h, d_k, d_model)
    bias = b_ref[...]                                          # (1, d_model) f32
    for bb in range(b_s):                                      # b_s small & static
        pv_b = pv[bb * h:(bb + 1) * h].astype(jnp.bfloat16)    # (h, nq, d_k)
        proj = jnp.einsum('hqd,hde->hqe', pv_b, w,
                          preferred_element_type=jnp.float32)  # (h, nq, d_model)
        out_ref[bb] = (jnp.sum(proj, axis=0) + bias).astype(out_ref.dtype)


def simplified_sdpa(queries, keys, values, w_o, b_o, *, h):
    """queries: (b, nq, d_model), keys/values: (b, nk, d_model)
       w_o: (d_model, d_model) PyTorch Linear weight (out, in); b_o: (d_model,)"""
    b_s, nq, d_model = queries.shape
    nk = keys.shape[1]
    d_k = d_model // h

    # Head split / permute / (b,h)->g flatten done in the wrapper (free layout
    # plumbing): the kernel sees contiguous (b*h, n, d_k) slabs.
    q_g = queries.reshape(b_s, nq, h, d_k).transpose(0, 2, 1, 3).reshape(b_s * h, nq, d_k)
    k_g = keys.reshape(b_s, nk, h, d_k).transpose(0, 2, 1, 3).reshape(b_s * h, nk, d_k)
    v_g = values.reshape(b_s, nk, h, d_k).transpose(0, 2, 1, 3).reshape(b_s * h, nk, d_k)

    # fc_o:  concat_h(pv_h) @ W^T + b  ==  sum_h pv_h @ (W^T)[h*d_k:(h+1)*d_k, :] + b
    w_heads = jnp.transpose(w_o).reshape(h, d_k, d_model)      # (h, d_k, d_model)
    bias = b_o.reshape(1, d_model)

    kernel = functools.partial(_sdpa_kernel, b_s=b_s, h=h, d_k=d_k)

    out, att = pl.pallas_call(
        kernel,
        out_shape=(
            jax.ShapeDtypeStruct((b_s, nq, d_model), queries.dtype),
            jax.ShapeDtypeStruct((b_s * h, nq, nk), jnp.float32),
        ),
    )(q_g, k_g, v_g, w_heads, bias)

    # Leading-dim reshape back to the module-native att layout (free in XLA).
    return out, att.reshape(b_s, h, nq, nk)


def reference_sdpa(queries, keys, values, w_o, b_o, *, h):
    """Pure-JAX reference mirroring the PyTorch forward."""
    b_s, nq, d_model = queries.shape
    nk = keys.shape[1]
    d_k = d_model // h
    q = queries.reshape(b_s, nq, h, d_k).transpose(0, 2, 1, 3)   # (b,h,nq,dk)
    k = keys.reshape(b_s, nk, h, d_k).transpose(0, 2, 3, 1)      # (b,h,dk,nk)
    v = values.reshape(b_s, nk, h, d_k).transpose(0, 2, 1, 3)    # (b,h,nk,dv)
    att = jnp.matmul(q, k) / math.sqrt(d_k)
    att = jax.nn.softmax(att, axis=-1)
    out = jnp.matmul(att, v).transpose(0, 2, 1, 3).reshape(b_s, nq, h * d_k)
    out = out @ w_o.T + b_o
    return out, att


if __name__ == "__main__":
    # Small shapes consistent with the module: d_model=32, h=4, b=2, nq=nk=8
    b_s, nq, nk, d_model, h = 2, 8, 8, 32, 4

    key = jax.random.PRNGKey(0)
    kq, kk, kv, kw = jax.random.split(key, 4)

    queries = jax.random.normal(kq, (b_s, nq, d_model), dtype=jnp.float32)
    keys_ = jax.random.normal(kk, (b_s, nk, d_model), dtype=jnp.float32)
    values = jax.random.normal(kv, (b_s, nk, d_model), dtype=jnp.float32)

    # fc_o init per Attention.init_weights: normal(std=0.001) weight, zero bias
    w_o = 0.001 * jax.random.normal(kw, (d_model, d_model), dtype=jnp.float32)
    b_o = jnp.zeros((d_model,), dtype=jnp.float32)

    out, att = simplified_sdpa(queries, keys_, values, w_o, b_o, h=h)
    out = jax.block_until_ready(out)
    att = jax.block_until_ready(att)

    out_ref, att_ref = reference_sdpa(queries, keys_, values, w_o, b_o, h=h)
    # Tolerances account for bf16 MXU operands (rel err ~4e-3 on scores/probs)
    # and the EUP approximate reciprocal on the PV path; out magnitudes are
    # ~5e-3 because fc_o weights have std=1e-3.
    assert jnp.allclose(out, out_ref, atol=1e-3, rtol=1e-2), "out mismatch"
    assert jnp.allclose(att, att_ref, atol=2e-2, rtol=2e-2), "att mismatch"

    print("KERNEL_OK")
</pallas_src>

<mosaic_0001>
module attributes {stable_mosaic.version = 11 : i64} {
  func.func @_sdpa_kernel(%arg0: memref<8x8x8xf32, #tpu.memory_space<vmem>>, %arg1: memref<8x8x8xf32, #tpu.memory_space<vmem>>, %arg2: memref<8x8x8xf32, #tpu.memory_space<vmem>>, %arg3: memref<4x8x32xf32, #tpu.memory_space<vmem>>, %arg4: memref<1x32xf32, #tpu.memory_space<vmem>>, %arg5: memref<2x8x32xf32, #tpu.memory_space<vmem>>, %arg6: memref<8x8x8xf32, #tpu.memory_space<vmem>>) attributes {dimension_semantics = [], scalar_prefetch = 0 : i64, scratch_operands = 0 : i64, tpu.core_type = #tpu.core_type<tc>} {
    %c0 = arith.constant 0 : index
    %c0_0 = arith.constant 0 : index
    %c0_1 = arith.constant 0 : index
    %0 = vector.load %arg0[%c0, %c0_0, %c0_1] : memref<8x8x8xf32, #tpu.memory_space<vmem>>, vector<8x8x8xf32>
    %cst = arith.constant 0.353553385 : f32
    %1 = vector.broadcast %cst : f32 to vector<8x8x8xf32>
    %2 = arith.mulf %0, %1 : vector<8x8x8xf32>
    %3 = arith.truncf %2 : vector<8x8x8xf32> to vector<8x8x8xbf16>
    %c0_2 = arith.constant 0 : index
    %c0_3 = arith.constant 0 : index
    %c0_4 = arith.constant 0 : index
    %4 = vector.load %arg1[%c0_2, %c0_3, %c0_4] : memref<8x8x8xf32, #tpu.memory_space<vmem>>, vector<8x8x8xf32>
    %5 = arith.truncf %4 : vector<8x8x8xf32> to vector<8x8x8xbf16>
    %c0_5 = arith.constant 0 : index
    %c0_6 = arith.constant 0 : index
    %c0_7 = arith.constant 0 : index
    %6 = vector.load %arg2[%c0_5, %c0_6, %c0_7] : memref<8x8x8xf32, #tpu.memory_space<vmem>>, vector<8x8x8xf32>
    %7 = arith.truncf %6 : vector<8x8x8xf32> to vector<8x8x8xbf16>
    "tpu.trace_start"() <{level = 10 : i32, message = "gqd,gkd->gqk"}> : () -> ()
    %cst_8 = arith.constant dense<0.000000e+00> : vector<8x8x8xf32>
    %8 = tpu.matmul %3, %5, %cst_8 {dimension_numbers = #tpu.dot_dimension_numbers<[2], [2], [1], [1], [0, 0, 0, 1, 1, 1], [0], [0]>} : vector<8x8x8xbf16>, vector<8x8x8xbf16>, vector<8x8x8xf32> -> vector<8x8x8xf32>
    "tpu.trace_stop"() : () -> ()
    %cst_9 = arith.constant dense<0xFF800000> : vector<8x8xf32>
    %9 = vector.multi_reduction <maximumf>, %8, %cst_9 [2] : vector<8x8x8xf32> to vector<8x8xf32>
    %10 = vector.shape_cast %9 : vector<8x8xf32> to vector<8x8x1xf32>
    %11 = vector.broadcast %10 : vector<8x8x1xf32> to vector<8x8x8xf32>
    %12 = arith.subf %8, %11 : vector<8x8x8xf32>
    %13 = math.exp %12 : vector<8x8x8xf32>
    %cst_10 = arith.constant dense<0.000000e+00> : vector<8x8xf32>
    %14 = vector.multi_reduction <add>, %13, %cst_10 [2] : vector<8x8x8xf32> to vector<8x8xf32>
    %15 = vector.shape_cast %14 : vector<8x8xf32> to vector<8x8x1xf32>
    %16 = tpu.reciprocal %15 : vector<8x8x1xf32> -> vector<8x8x1xf32>
    %17 = vector.broadcast %16 : vector<8x8x1xf32> to vector<8x8x8xf32>
    %18 = arith.mulf %13, %17 : vector<8x8x8xf32>
    %c0_11 = arith.constant 0 : index
    %c0_12 = arith.constant 0 : index
    %c0_13 = arith.constant 0 : index
    %19 = vector.load %arg6[%c0_11, %c0_12, %c0_13] : memref<8x8x8xf32, #tpu.memory_space<vmem>>, vector<8x8x8xf32>
    tpu.vector_store %arg6[%c0_11, %c0_12, %c0_13], %18 {strides = array<i32>} : memref<8x8x8xf32, #tpu.memory_space<vmem>>, vector<8x8x8xf32>,
    %20 = tpu.reciprocal %15 {approx = true} : vector<8x8x1xf32> -> vector<8x8x1xf32>
    %21 = vector.broadcast %20 : vector<8x8x1xf32> to vector<8x8x8xf32>
    %22 = arith.mulf %13, %21 : vector<8x8x8xf32>
    %23 = arith.truncf %22 : vector<8x8x8xf32> to vector<8x8x8xbf16>
    "tpu.trace_start"() <{level = 10 : i32, message = "gqk,gkd->gqd"}> : () -> ()
    %cst_14 = arith.constant dense<0.000000e+00> : vector<8x8x8xf32>
    %24 = tpu.matmul %23, %7, %cst_14 {dimension_numbers = #tpu.dot_dimension_numbers<[2], [1], [1], [2], [0, 0, 0, 1, 1, 2], [0], [0]>} : vector<8x8x8xbf16>, vector<8x8x8xbf16>, vector<8x8x8xf32> -> vector<8x8x8xf32>
    "tpu.trace_stop"() : () -> ()
    %c0_15 = arith.constant 0 : index
    %c0_16 = arith.constant 0 : index
    %c0_17 = arith.constant 0 : index
    %25 = vector.load %arg3[%c0_15, %c0_16, %c0_17] : memref<4x8x32xf32, #tpu.memory_space<vmem>>, vector<4x8x32xf32>
    %26 = arith.truncf %25 : vector<4x8x32xf32> to vector<4x8x32xbf16>
    %c0_18 = arith.constant 0 : index
    %c0_19 = arith.constant 0 : index
    %27 = vector.load %arg4[%c0_18, %c0_19] : memref<1x32xf32, #tpu.memory_space<vmem>>, vector<1x32xf32>
    %28 = vector.extract_strided_slice %24 {offsets = [0, 0, 0], sizes = [4, 8, 8], strides = [1, 1, 1]} : vector<8x8x8xf32> to vector<4x8x8xf32>
    %29 = arith.truncf %28 : vector<4x8x8xf32> to vector<4x8x8xbf16>
    "tpu.trace_start"() <{level = 10 : i32, message = "hqd,hde->hqe"}> : () -> ()
    %cst_20 = arith.constant dense<0.000000e+00> : vector<4x8x32xf32>
    %30 = tpu.matmul %29, %26, %cst_20 {dimension_numbers = #tpu.dot_dimension_numbers<[2], [1], [1], [2], [0, 0, 0, 1, 1, 2], [0], [0]>} : vector<4x8x8xbf16>, vector<4x8x32xbf16>, vector<4x8x32xf32> -> vector<4x8x32xf32>
    "tpu.trace_stop"() : () -> ()
    %cst_21 = arith.constant dense<0.000000e+00> : vector<8x32xf32>
    %31 = vector.multi_reduction <add>, %30, %cst_21 [0] : vector<4x8x32xf32> to vector<8x32xf32>
    %32 = vector.broadcast %27 : vector<1x32xf32> to vector<8x32xf32>
    %33 = arith.addf %31, %32 : vector<8x32xf32>
    %c0_22 = arith.constant 0 : index
    %c0_23 = arith.constant 0 : index
    %c0_24 = arith.constant 0 : index
    %34 = vector.load %arg5[%c0_22, %c0_23, %c0_24] : memref<2x8x32xf32, #tpu.memory_space<vmem>>, vector<1x8x32xf32>
    %35 = vector.shape_cast %34 : vector<1x8x32xf32> to vector<8x32xf32>
    %36 = vector.shape_cast %33 : vector<8x32xf32> to vector<1x8x32xf32>
    tpu.vector_store %arg5[%c0_22, %c0_23, %c0_24], %36 {strides = array<i32>} : memref<2x8x32xf32, #tpu.memory_space<vmem>>, vector<1x8x32xf32>,
    %37 = vector.extract_strided_slice %24 {offsets = [4, 0, 0], sizes = [4, 8, 8], strides = [1, 1, 1]} : vector<8x8x8xf32> to vector<4x8x8xf32>
    %38 = arith.truncf %37 : vector<4x8x8xf32> to vector<4x8x8xbf16>
    "tpu.trace_start"() <{level = 10 : i32, message = "hqd,hde->hqe"}> : () -> ()
    %cst_25 = arith.constant dense<0.000000e+00> : vector<4x8x32xf32>
    %39 = tpu.matmul %38, %26, %cst_25 {dimension_numbers = #tpu.dot_dimension_numbers<[2], [1], [1], [2], [0, 0, 0, 1, 1, 2], [0], [0]>} : vector<4x8x8xbf16>, vector<4x8x32xbf16>, vector<4x8x32xf32> -> vector<4x8x32xf32>
    "tpu.trace_stop"() : () -> ()
    %cst_26 = arith.constant dense<0.000000e+00> : vector<8x32xf32>
    %40 = vector.multi_reduction <add>, %39, %cst_26 [0] : vector<4x8x32xf32> to vector<8x32xf32>
    %41 = vector.broadcast %27 : vector<1x32xf32> to vector<8x32xf32>
    %42 = arith.addf %40, %41 : vector<8x32xf32>
    %c1 = arith.constant 1 : index
    %c0_27 = arith.constant 0 : index
    %c0_28 = arith.constant 0 : index
    %43 = vector.load %arg5[%c1, %c0_27, %c0_28] : memref<2x8x32xf32, #tpu.memory_space<vmem>>, vector<1x8x32xf32>
    %44 = vector.shape_cast %43 : vector<1x8x32xf32> to vector<8x32xf32>
    %45 = vector.shape_cast %42 : vector<8x32xf32> to vector<1x8x32xf32>
    tpu.vector_store %arg5[%c1, %c0_27, %c0_28], %45 {strides = array<i32>} : memref<2x8x32xf32, #tpu.memory_space<vmem>>, vector<1x8x32xf32>,
    return
  }
}

</mosaic_0001>

<llo_original>
// kernel: tpu_custom_call.1
$region0: #{tpu_custom_call.1}
  #allocation0 [shape = 'u32[]', space=smem, size = 0x4, offset = 0x4, fixed_abs, tag = 'smem constant byte address 0x4 - core index']
  #allocation1 [shape = 'u32[144,128]{1,0:T(1,128)}', space=vmem, size = 0x12000, scoped, tag = 'internal scratch']
  %s0 = inlined_call_operand.hbm [shape: f32[8,8,8], index: 0, kind: input, shape index: {}]
  %s1 = inlined_call_operand.hbm [shape: f32[8,8,8], index: 1, kind: input, shape index: {}]
  %s2 = inlined_call_operand.hbm [shape: f32[8,8,8], index: 2, kind: input, shape index: {}]
  %s3 = inlined_call_operand.hbm [shape: f32[4,8,32], index: 3, kind: input, shape index: {}]
  %s4 = inlined_call_operand.vmem [shape: f32[1,32], index: 4, kind: input, shape index: {}]
  %s5 = inlined_call_operand.hbm [shape: f32[2,8,32], index: 5, kind: output, shape index: {0}]
  %s6 = inlined_call_operand.hbm [shape: f32[8,8,8], index: 6, kind: output, shape index: {1}]
  %7 = xla_tuple %s5, %s6
  %s8 = sld [smem:[#allocation0]]
  $region54: #{tpu_custom_call.1} parent=0
    _
  %s10 = ssub.s32 1, %s8
  %s11 = scalar_select 0, %s10, %s8
  $region1: #{tpu_custom_call.1} parent=0
    #allocation2 [shape = 'u8[32768]{0}', space=vmem, size = 0x8000, scoped, tag = 'input window, operand 0, single buffered']
    #allocation3 [shape = 's32[1]{0}', space=sflag, size = 0x4, scoped, tag = 'scoped memory for tpu_custom_call.1']
    #allocation4 [shape = 's32[1]{0}', space=sflag, size = 0x4, scoped, tag = 'scoped memory for tpu_custom_call.1']
    #allocation5 [shape = 'u8[32768]{0}', space=vmem, size = 0x8000, scoped, tag = 'input window, operand 1, single buffered']
    #allocation6 [shape = 's32[1]{0}', space=sflag, size = 0x4, scoped, tag = 'scoped memory for tpu_custom_call.1']
    #allocation7 [shape = 'u8[32768]{0}', space=vmem, size = 0x8000, scoped, tag = 'input window, operand 2, single buffered']
    #allocation8 [shape = 'u8[16384]{0}', space=vmem, size = 0x4000, scoped, tag = 'input window, operand 3, single buffered']
    #allocation9 [shape = 's32[1]{0}', space=sflag, size = 0x4, scoped, tag = 'scoped memory for tpu_custom_call.1']
    #allocation10 [shape = 'u8[8192]{0}', space=vmem, size = 0x2000, scoped, tag = 'output window, operand 0, single buffered']
    #allocation11 [shape = 'u8[32768]{0}', space=vmem, size = 0x8000, scoped, tag = 'output window, operand 1, single buffered']
    #allocation12 [shape = 's32[1]{0}', space=sflag, size = 0x4, scoped, tag = 'scoped memory for tpu_custom_call.1']
    %12 = vsyncpa [#allocation3], 0
    %13 = vsyncpa [#allocation6], 0
    %14 = vsyncpa [#allocation9], 0
    %15 = vsyncpa [#allocation4], 0
    %16 = vsyncpa [#allocation12], 0
    // Predicated region
    $region2: #{tpu_custom_call.1} parent=1 // pred_check
      _
    $region3: #{tpu_custom_call.1} parent=1 // pred_check_branch
      %18 = sbr.rel (0) target = $region5
    $region4: #{tpu_custom_call.1} parent=1 // pred_region
      %s20 = ssub.s32 1024, 1024
      %21 = vsyncadd [#allocation3], %s20
      %s22 = sshll.u32 [#allocation2], 4
      %s23 = int_to_ptr.vmem [resolvable:$true] %s22
      %28 = dma.hbm_to_vmem [thread:$0]  %s0, 1024, %s23, [#allocation3], 128, 128, 8
    $region5: #{tpu_custom_call.1} parent=1 // pred_fallthru
      _
    // Predicated region
    $region6: #{tpu_custom_call.1} parent=1 // pred_check
      _
    $region7: #{tpu_custom_call.1} parent=1 // pred_check_branch
      %30 = sbr.rel (0) target = $region9
    $region8: #{tpu_custom_call.1} parent=1 // pred_region
      %s32 = ssub.s32 1024, 1024
      %33 = vsyncadd [#allocation6], %s32
      %s34 = sshll.u32 [#allocation5], 4
      %s35 = int_to_ptr.vmem [resolvable:$true] %s34
      %40 = dma.hbm_to_vmem [thread:$0]  %s1, 1024, %s35, [#allocation6], 128, 128, 8
    $region9: #{tpu_custom_call.1} parent=1 // pred_fallthru
      _
    // Predicated region
    $region10: #{tpu_custom_call.1} parent=1 // pred_check
      _
    $region11: #{tpu_custom_call.1} parent=1 // pred_check_branch
      %42 = sbr.rel (0) target = $region13
    $region12: #{tpu_custom_call.1} parent=1 // pred_region
      %s44 = ssub.s32 1024, 1024
      %45 = vsyncadd [#allocation6], %s44
      %s46 = sshll.u32 [#allocation7], 4
      %s47 = int_to_ptr.vmem [resolvable:$true] %s46
      %52 = dma.hbm_to_vmem [thread:$0]  %s2, 1024, %s47, [#allocation6], 128, 128, 8
    $region13: #{tpu_custom_call.1} parent=1 // pred_fallthru
      _
    // Predicated region
    $region14: #{tpu_custom_call.1} parent=1 // pred_check
      _
    $region15: #{tpu_custom_call.1} parent=1 // pred_check_branch
      %54 = sbr.rel (0) target = $region17
    $region16: #{tpu_custom_call.1} parent=1 // pred_region
      %s56 = ssub.s32 512, 512
      %57 = vsyncadd [#allocation9], %s56
      %s58 = sshll.u32 [#allocation8], 4
      %s59 = int_to_ptr.vmem [resolvable:$true] %s58
      %64 = dma.hbm_to_vmem [thread:$0]  %s3, 512, %s59, [#allocation9], 128, 128, 8
    $region17: #{tpu_custom_call.1} parent=1 // pred_fallthru
      _
    // Predicated region
    $region18: #{tpu_custom_call.1} parent=1 // pred_check
      _
    $region19: #{tpu_custom_call.1} parent=1 // pred_check_branch
      %66 = sbr.rel (0) target = $region21
    $region20: #{tpu_custom_call.1} parent=1 // pred_region
      _
    $region21: #{tpu_custom_call.1} parent=1 // pred_fallthru
      _
    // Predicated region
    $region22: #{tpu_custom_call.1} parent=1 // pred_check
      _
    $region23: #{tpu_custom_call.1} parent=1 // pred_check_branch
      %68 = sbr.rel (0) target = $region25
    $region24: #{tpu_custom_call.1} parent=1 // pred_region
      %69 = dma.done [#allocation3], 1024
    $region25: #{tpu_custom_call.1} parent=1 // pred_fallthru
      _
    // Predicated region
    $region26: #{tpu_custom_call.1} parent=1 // pred_check
      _
    $region27: #{tpu_custom_call.1} parent=1 // pred_check_branch
      %71 = sbr.rel (0) target = $region29
    $region28: #{tpu_custom_call.1} parent=1 // pred_region
      %72 = dma.done [#allocation6], 1024
    $region29: #{tpu_custom_call.1} parent=1 // pred_fallthru
      _
    // Predicated region
    $region30: #{tpu_custom_call.1} parent=1 // pred_check
      _
    $region31: #{tpu_custom_call.1} parent=1 // pred_check_branch
      %74 = sbr.rel (0) target = $region33
    $region32: #{tpu_custom_call.1} parent=1 // pred_region
      %75 = dma.done [#allocation6], 1024
    $region33: #{tpu_custom_call.1} parent=1 // pred_fallthru
      _
    // Predicated region
    $region34: #{tpu_custom_call.1} parent=1 // pred_check
      _
    $region35: #{tpu_custom_call.1} parent=1 // pred_check_branch
      %77 = sbr.rel (0) target = $region37
    $region36: #{tpu_custom_call.1} parent=1 // pred_region
      %78 = dma.done [#allocation9], 512
    $region37: #{tpu_custom_call.1} parent=1 // pred_fallthru
      _
    %v80 = vld [vmem:[#allocation2] sm:$0xff]
    %v81 = vld [vmem:[#allocation2 + $0x8] sm:$0xff]
    %v82 = vld [vmem:[#allocation2 + $0x10] sm:$0xff]
    %v83 = vld [vmem:[#allocation2 + $0x18] sm:$0xff]
    %v84 = vld [vmem:[#allocation2 + $0x20] sm:$0xff]
    %v85 = vld [vmem:[#allocation2 + $0x28] sm:$0xff]
    %v86 = vld [vmem:[#allocation2 + $0x30] sm:$0xff]
    %v87 = vld [vmem:[#allocation2 + $0x38] sm:$0xff]
    %v88 = vmul.f32 %v80, 0.35355338
    %v89 = vmul.f32 %v81, 0.35355338
    %v90 = vmul.f32 %v82, 0.35355338
    %v91 = vmul.f32 %v83, 0.35355338
    %v92 = vmul.f32 %v84, 0.35355338
    %v93 = vmul.f32 %v85, 0.35355338
    %v94 = vmul.f32 %v86, 0.35355338
    %v95 = vmul.f32 %v87, 0.35355338
    %v96 = vpack.c.bf16 %v88, %v88
    %v97 = vpack.c.bf16 %v89, %v89
    %v98 = vpack.c.bf16 %v90, %v90
    %v99 = vpack.c.bf16 %v91, %v91
    %v100 = vpack.c.bf16 %v92, %v92
    %v101 = vpack.c.bf16 %v93, %v93
    %v102 = vpack.c.bf16 %v94, %v94
    %v103 = vpack.c.bf16 %v95, %v95
    %v104 = vld [vmem:[#allocation5] sm:$0xff]
    %v105 = vld [vmem:[#allocation5 + $0x8] sm:$0xff]
    %v106 = vld [vmem:[#allocation5 + $0x10] sm:$0xff]
    %v107 = vld [vmem:[#allocation5 + $0x18] sm:$0xff]
    %v108 = vld [vmem:[#allocation5 + $0x20] sm:$0xff]
    %v109 = vld [vmem:[#allocation5 + $0x28] sm:$0xff]
    %v110 = vld [vmem:[#allocation5 + $0x30] sm:$0xff]
    %v111 = vld [vmem:[#allocation5 + $0x38] sm:$0xff]
    %v112 = vpack.c.bf16 %v104, %v104
    %v113 = vpack.c.bf16 %v105, %v105
    %v114 = vpack.c.bf16 %v106, %v106
    %v115 = vpack.c.bf16 %v107, %v107
    %v116 = vpack.c.bf16 %v108, %v108
    %v117 = vpack.c.bf16 %v109, %v109
    %v118 = vpack.c.bf16 %v110, %v110
    %v119 = vpack.c.bf16 %v111, %v111
    %v120 = vld [vmem:[#allocation7] sm:$0xff]
    %v121 = vld [vmem:[#allocation7 + $0x8] sm:$0xff]
    %v122 = vld [vmem:[#allocation7 + $0x10] sm:$0xff]
    %v123 = vld [vmem:[#allocation7 + $0x18] sm:$0xff]
    %v124 = vld [vmem:[#allocation7 + $0x20] sm:$0xff]
    %v125 = vld [vmem:[#allocation7 + $0x28] sm:$0xff]
    %v126 = vld [vmem:[#allocation7 + $0x30] sm:$0xff]
    %v127 = vld [vmem:[#allocation7 + $0x38] sm:$0xff]
    %v128 = vpack.c.bf16 %v120, %v120
    %v129 = vpack.c.bf16 %v121, %v121
    %v130 = vpack.c.bf16 %v122, %v122
    %v131 = vpack.c.bf16 %v123, %v123
    %v132 = vpack.c.bf16 %v124, %v124
    %v133 = vpack.c.bf16 %v125, %v125
    %v134 = vpack.c.bf16 %v126, %v126
    %v135 = vpack.c.bf16 %v127, %v127
    %vm136 = vcmask 64512
    %v138 = vsel %vm136, %v96, 0
    %v141 = vsel %vm136, %v112, 0
    %143 = vmatprep.subr.bf16.mxu0 0
    %144 = vmatpush1.bf16.xpose.msra.mxu0 %v141
    %145 = vmatprep.subr.bf16.mxu0 0
    %146 = vmatpush1.bf16.xpose.msra.mxu0 0
    %147 = vmatprep.subr.bf16.mxu0 0
    %148 = vmatpush1.bf16.xpose.msra.mxu0 0
    %149 = vmatprep.subr.bf16.mxu0 0
    %150 = vmatpush1.bf16.xpose.msra.mxu0 0
    %151 = vmatprep.subr.bf16.mxu0 0
    %152 = vmatpush1.bf16.xpose.msra.mxu0 0
    %153 = vmatprep.subr.bf16.mxu0 0
    %154 = vmatpush1.bf16.xpose.msra.mxu0 0
    %155 = vmatprep.subr.bf16.mxu0 0
    %156 = vmatpush1.bf16.xpose.msra.mxu0 0
    %157 = vmatprep.subr.bf16.mxu0 0
    %158 = vmatpush1.bf16.xpose.msra.mxu0 0
    %159 = vmatprep.subr.bf16.mxu0 0
    %160 = vmatpush1.bf16.xpose.msra.mxu0 0
    %161 = vmatprep.subr.bf16.mxu0 0
    %162 = vmatpush1.bf16.xpose.msra.mxu0 0
    %163 = vmatprep.subr.bf16.mxu0 0
    %164 = vmatpush1.bf16.xpose.msra.mxu0 0
    %165 = vmatprep.subr.bf16.mxu0 0
    %166 = vmatpush1.bf16.xpose.msra.mxu0 0
    %167 = vmatprep.subr.bf16.mxu0 0
    %168 = vmatpush1.bf16.xpose.msra.mxu0 0
    %169 = vmatprep.subr.bf16.mxu0 0
    %170 = vmatpush1.bf16.xpose.msra.mxu0 0
    %171 = vmatprep.subr.bf16.mxu0 0
    %172 = vmatpush1.bf16.xpose.msra.mxu0 0
    %173 = vmatprep.subr.bf16.mxu0 0
    %174 = vmatpush1.bf16.xpose.msra.mxu0 0
    %175 = vmatprep.mubr.bf16.mxu0 0
    %176 = vmatmul.mubr.bf16.gmra.mrb[0].mxu0 %v138
    %v177 = vpop.f32.mrb[0].mxu0
    %v178 = vadd.f32 0.0, %v177
    %v179 = vpop.f32.mrb[0].mxu0
    %v180 = vpop.f32.mrb[0].mxu0
    %v181 = vpop.f32.mrb[0].mxu0
    %182 = vdwg.mxu0
    %v184 = vsel %vm136, %v97, 0
    %v187 = vsel %vm136, %v113, 0
    %189 = vmatprep.subr.bf16.mxu0 0
    %190 = vmatpush1.bf16.xpose.msra.mxu0 %v187
    %191 = vmatprep.subr.bf16.mxu0 0
    %192 = vmatpush1.bf16.xpose.msra.mxu0 0
    %193 = vmatprep.subr.bf16.mxu0 0
    %194 = vmatpush1.bf16.xpose.msra.mxu0 0
    %195 = vmatprep.subr.bf16.mxu0 0
    %196 = vmatpush1.bf16.xpose.msra.mxu0 0
    %197 = vmatprep.subr.bf16.mxu0 0
    %198 = vmatpush1.bf16.xpose.msra.mxu0 0
    %199 = vmatprep.subr.bf16.mxu0 0
    %200 = vmatpush1.bf16.xpose.msra.mxu0 0
    %201 = vmatprep.subr.bf16.mxu0 0
    %202 = vmatpush1.bf16.xpose.msra.mxu0 0
    %203 = vmatprep.subr.bf16.mxu0 0
    %204 = vmatpush1.bf16.xpose.msra.mxu0 0
    %205 = vmatprep.subr.bf16.mxu0 0
    %206 = vmatpush1.bf16.xpose.msra.mxu0 0
    %207 = vmatprep.subr.bf16.mxu0 0
    %208 = vmatpush1.bf16.xpose.msra.mxu0 0
    %209 = vmatprep.subr.bf16.mxu0 0
    %210 = vmatpush1.bf16.xpose.msra.mxu0 0
    %211 = vmatprep.subr.bf16.mxu0 0
    %212 = vmatpush1.bf16.xpose.msra.mxu0 0
    %213 = vmatprep.subr.bf16.mxu0 0
    %214 = vmatpush1.bf16.xpose.msra.mxu0 0
    %215 = vmatprep.subr.bf16.mxu0 0
    %216 = vmatpush1.bf16.xpose.msra.mxu0 0
    %217 = vmatprep.subr.bf16.mxu0 0
    %218 = vmatpush1.bf16.xpose.msra.mxu0 0
    %219 = vmatprep.subr.bf16.mxu0 0
    %220 = vmatpush1.bf16.xpose.msra.mxu0 0
    %221 = vmatprep.mubr.bf16.mxu0 0
    %222 = vmatmul.mubr.bf16.gmra.mrb[0].mxu0 %v184
    %v223 = vpop.f32.mrb[0].mxu0
    %v224 = vadd.f32 0.0, %v223
    %v225 = vpop.f32.mrb[0].mxu0
    %v226 = vpop.f32.mrb[0].mxu0
    %v227 = vpop.f32.mrb[0].mxu0
    %228 = vdwg.mxu0
    %v230 = vsel %vm136, %v98, 0
    %v233 = vsel %vm136, %v114, 0
    %235 = vmatprep.subr.bf16.mxu0 0
    %236 = vmatpush1.bf16.xpose.msra.mxu0 %v233
    %237 = vmatprep.subr.bf16.mxu0 0
    %238 = vmatpush1.bf16.xpose.msra.mxu0 0
    %239 = vmatprep.subr.bf16.mxu0 0
    %240 = vmatpush1.bf16.xpose.msra.mxu0 0
    %241 = vmatprep.subr.bf16.mxu0 0
    %242 = vmatpush1.bf16.xpose.msra.mxu0 0
    %243 = vmatprep.subr.bf16.mxu0 0
    %244 = vmatpush1.bf16.xpose.msra.mxu0 0
    %245 = vmatprep.subr.bf16.mxu0 0
    %246 = vmatpush1.bf16.xpose.msra.mxu0 0
    %247 = vmatprep.subr.bf16.mxu0 0
    %248 = vmatpush1.bf16.xpose.msra.mxu0 0
    %249 = vmatprep.subr.bf16.mxu0 0
    %250 = vmatpush1.bf16.xpose.msra.mxu0 0
    %251 = vmatprep.subr.bf16.mxu0 0
    %252 = vmatpush1.bf16.xpose.msra.mxu0 0
    %253 = vmatprep.subr.bf16.mxu0 0
    %254 = vmatpush1.bf16.xpose.msra.mxu0 0
    %255 = vmatprep.subr.bf16.mxu0 0
    %256 = vmatpush1.bf16.xpose.msra.mxu0 0
    %257 = vmatprep.subr.bf16.mxu0 0
    %258 = vmatpush1.bf16.xpose.msra.mxu0 0
    %259 = vmatprep.subr.bf16.mxu0 0
    %260 = vmatpush1.bf16.xpose.msra.mxu0 0
    %261 = vmatprep.subr.bf16.mxu0 0
    %262 = vmatpush1.bf16.xpose.msra.mxu0 0
    %263 = vmatprep.subr.bf16.mxu0 0
    %264 = vmatpush1.bf16.xpose.msra.mxu0 0
    %265 = vmatprep.subr.bf16.mxu0 0
    %266 = vmatpush1.bf16.xpose.msra.mxu0 0
    %267 = vmatprep.mubr.bf16.mxu0 0
    %268 = vmatmul.mubr.bf16.gmra.mrb[0].mxu0 %v230
    %v269 = vpop.f32.mrb[0].mxu0
    %v270 = vadd.f32 0.0, %v269
    %v271 = vpop.f32.mrb[0].mxu0
    %v272 = vpop.f32.mrb[0].mxu0
    %v273 = vpop.f32.mrb[0].mxu0
    %274 = vdwg.mxu0
    %v276 = vsel %vm136, %v99, 0
    %v279 = vsel %vm136, %v115, 0
    %281 = vmatprep.subr.bf16.mxu0 0
    %282 = vmatpush1.bf16.xpose.msra.mxu0 %v279
    %283 = vmatprep.subr.bf16.mxu0 0
    %284 = vmatpush1.bf16.xpose.msra.mxu0 0
    %285 = vmatprep.subr.bf16.mxu0 0
    %286 = vmatpush1.bf16.xpose.msra.mxu0 0
    %287 = vmatprep.subr.bf16.mxu0 0
    %288 = vmatpush1.bf16.xpose.msra.mxu0 0
    %289 = vmatprep.subr.bf16.mxu0 0
    %290 = vmatpush1.bf16.xpose.msra.mxu0 0
    %291 = vmatprep.subr.bf16.mxu0 0
    %292 = vmatpush1.bf16.xpose.msra.mxu0 0
    %293 = vmatprep.subr.bf16.mxu0 0
    %294 = vmatpush1.bf16.xpose.msra.mxu0 0
    %295 = vmatprep.subr.bf16.mxu0 0
    %296 = vmatpush1.bf16.xpose.msra.mxu0 0
    %297 = vmatprep.subr.bf16.mxu0 0
    %298 = vmatpush1.bf16.xpose.msra.mxu0 0
    %299 = vmatprep.subr.bf16.mxu0 0
    %300 = vmatpush1.bf16.xpose.msra.mxu0 0
    %301 = vmatprep.subr.bf16.mxu0 0
    %302 = vmatpush1.bf16.xpose.msra.mxu0 0
    %303 = vmatprep.subr.bf16.mxu0 0
    %304 = vmatpush1.bf16.xpose.msra.mxu0 0
    %305 = vmatprep.subr.bf16.mxu0 0
    %306 = vmatpush1.bf16.xpose.msra.mxu0 0
    %307 = vmatprep.subr.bf16.mxu0 0
    %308 = vmatpush1.bf16.xpose.msra.mxu0 0
    %309 = vmatprep.subr.bf16.mxu0 0
    %310 = vmatpush1.bf16.xpose.msra.mxu0 0
    %311 = vmatprep.subr.bf16.mxu0 0
    %312 = vmatpush1.bf16.xpose.msra.mxu0 0
    %313 = vmatprep.mubr.bf16.mxu0 0
    %314 = vmatmul.mubr.bf16.gmra.mrb[0].mxu0 %v276
    %v315 = vpop.f32.mrb[0].mxu0
    %v316 = vadd.f32 0.0, %v315
    %v317 = vpop.f32.mrb[0].mxu0
    %v318 = vpop.f32.mrb[0].mxu0
    %v319 = vpop.f32.mrb[0].mxu0
    %320 = vdwg.mxu0
    %v322 = vsel %vm136, %v100, 0
    %v325 = vsel %vm136, %v116, 0
    %327 = vmatprep.subr.bf16.mxu0 0
    %328 = vmatpush1.bf16.xpose.msra.mxu0 %v325
    %329 = vmatprep.subr.bf16.mxu0 0
    %330 = vmatpush1.bf16.xpose.msra.mxu0 0
    %331 = vmatprep.subr.bf16.mxu0 0
    %332 = vmatpush1.bf16.xpose.msra.mxu0 0
    %333 = vmatprep.subr.bf16.mxu0 0
    %334 = vmatpush1.bf16.xpose.msra.mxu0 0
    %335 = vmatprep.subr.bf16.mxu0 0
    %336 = vmatpush1.bf16.xpose.msra.mxu0 0
    %337 = vmatprep.subr.bf16.mxu0 0
    %338 = vmatpush1.bf16.xpose.msra.mxu0 0
    %339 = vmatprep.subr.bf16.mxu0 0
    %340 = vmatpush1.bf16.xpose.msra.mxu0 0
    %341 = vmatprep.subr.bf16.mxu0 0
    %342 = vmatpush1.bf16.xpose.msra.mxu0 0
    %343 = vmatprep.subr.bf16.mxu0 0
    %344 = vmatpush1.bf16.xpose.msra.mxu0 0
    %345 = vmatprep.subr.bf16.mxu0 0
    %346 = vmatpush1.bf16.xpose.msra.mxu0 0
    %347 = vmatprep.subr.bf16.mxu0 0
    %348 = vmatpush1.bf16.xpose.msra.mxu0 0
    %349 = vmatprep.subr.bf16.mxu0 0
    %350 = vmatpush1.bf16.xpose.msra.mxu0 0
    %351 = vmatprep.subr.bf16.mxu0 0
    %352 = vmatpush1.bf16.xpose.msra.mxu0 0
    %353 = vmatprep.subr.bf16.mxu0 0
    %354 = vmatpush1.bf16.xpose.msra.mxu0 0
    %355 = vmatprep.subr.bf16.mxu0 0
    %356 = vmatpush1.bf16.xpose.msra.mxu0 0
    %357 = vmatprep.subr.bf16.mxu0 0
    %358 = vmatpush1.bf16.xpose.msra.mxu0 0
    %359 = vmatprep.mubr.bf16.mxu0 0
    %360 = vmatmul.mubr.bf16.gmra.mrb[0].mxu0 %v322
    %v361 = vpop.f32.mrb[0].mxu0
    %v362 = vadd.f32 0.0, %v361
    %v363 = vpop.f32.mrb[0].mxu0
    %v364 = vpop.f32.mrb[0].mxu0
    %v365 = vpop.f32.mrb[0].mxu0
    %366 = vdwg.mxu0
    %v368 = vsel %vm136, %v101, 0
    %v371 = vsel %vm136, %v117, 0
    %373 = vmatprep.subr.bf16.mxu0 0
    %374 = vmatpush1.bf16.xpose.msra.mxu0 %v371
    %375 = vmatprep.subr.bf16.mxu0 0
    %376 = vmatpush1.bf16.xpose.msra.mxu0 0
    %377 = vmatprep.subr.bf16.mxu0 0
    %378 = vmatpush1.bf16.xpose.msra.mxu0 0
    %379 = vmatprep.subr.bf16.mxu0 0
    %380 = vmatpush1.bf16.xpose.msra.mxu0 0
    %381 = vmatprep.subr.bf16.mxu0 0
    %382 = vmatpush1.bf16.xpose.msra.mxu0 0
    %383 = vmatprep.subr.bf16.mxu0 0
    %384 = vmatpush1.bf16.xpose.msra.mxu0 0
    %385 = vmatprep.subr.bf16.mxu0 0
    %386 = vmatpush1.bf16.xpose.msra.mxu0 0
    %387 = vmatprep.subr.bf16.mxu0 0
    %388 = vmatpush1.bf16.xpose.msra.mxu0 0
    %389 = vmatprep.subr.bf16.mxu0 0
    %390 = vmatpush1.bf16.xpose.msra.mxu0 0
    %391 = vmatprep.subr.bf16.mxu0 0
    %392 = vmatpush1.bf16.xpose.msra.mxu0 0
    %393 = vmatprep.subr.bf16.mxu0 0
    %394 = vmatpush1.bf16.xpose.msra.mxu0 0
    %395 = vmatprep.subr.bf16.mxu0 0
    %396 = vmatpush1.bf16.xpose.msra.mxu0 0
    %397 = vmatprep.subr.bf16.mxu0 0
    %398 = vmatpush1.bf16.xpose.msra.mxu0 0
    %399 = vmatprep.subr.bf16.mxu0 0
    %400 = vmatpush1.bf16.xpose.msra.mxu0 0
    %401 = vmatprep.subr.bf16.mxu0 0
    %402 = vmatpush1.bf16.xpose.msra.mxu0 0
    %403 = vmatprep.subr.bf16.mxu0 0
    %404 = vmatpush1.bf16.xpose.msra.mxu0 0
    %405 = vmatprep.mubr.bf16.mxu0 0
    %406 = vmatmul.mubr.bf16.gmra.mrb[0].mxu0 %v368
    %v407 = vpop.f32.mrb[0].mxu0
    %v408 = vadd.f32 0.0, %v407
    %v409 = vpop.f32.mrb[0].mxu0
    %v410 = vpop.f32.mrb[0].mxu0
    %v411 = vpop.f32.mrb[0].mxu0
    %412 = vdwg.mxu0
    %v414 = vsel %vm136, %v102, 0
    %v417 = vsel %vm136, %v118, 0
    %419 = vmatprep.subr.bf16.mxu0 0
    %420 = vmatpush1.bf16.xpose.msra.mxu0 %v417
    %421 = vmatprep.subr.bf16.mxu0 0
    %422 = vmatpush1.bf16.xpose.msra.mxu0 0
    %423 = vmatprep.subr.bf16.mxu0 0
    %424 = vmatpush1.bf16.xpose.msra.mxu0 0
    %425 = vmatprep.subr.bf16.mxu0 0
    %426 = vmatpush1.bf16.xpose.msra.mxu0 0
    %427 = vmatprep.subr.bf16.mxu0 0
    %428 = vmatpush1.bf16.xpose.msra.mxu0 0
    %429 = vmatprep.subr.bf16.mxu0 0
    %430 = vmatpush1.bf16.xpose.msra.mxu0 0
    %431 = vmatprep.subr.bf16.mxu0 0
    %432 = vmatpush1.bf16.xpose.msra.mxu0 0
    %433 = vmatprep.subr.bf16.mxu0 0
    %434 = vmatpush1.bf16.xpose.msra.mxu0 0
    %435 = vmatprep.subr.bf16.mxu0 0
    %436 = vmatpush1.bf16.xpose.msra.mxu0 0
    %437 = vmatprep.subr.bf16.mxu0 0
    %438 = vmatpush1.bf16.xpose.msra.mxu0 0
    %439 = vmatprep.subr.bf16.mxu0 0
    %440 = vmatpush1.bf16.xpose.msra.mxu0 0
    %441 = vmatprep.subr.bf16.mxu0 0
    %442 = vmatpush1.bf16.xpose.msra.mxu0 0
    %443 = vmatprep.subr.bf16.mxu0 0
    %444 = vmatpush1.bf16.xpose.msra.mxu0 0
    %445 = vmatprep.subr.bf16.mxu0 0
    %446 = vmatpush1.bf16.xpose.msra.mxu0 0
    %447 = vmatprep.subr.bf16.mxu0 0
    %448 = vmatpush1.bf16.xpose.msra.mxu0 0
    %449 = vmatprep.subr.bf16.mxu0 0
    %450 = vmatpush1.bf16.xpose.msra.mxu0 0
    %451 = vmatprep.mubr.bf16.mxu0 0
    %452 = vmatmul.mubr.bf16.gmra.mrb[0].mxu0 %v414
    %v453 = vpop.f32.mrb[0].mxu0
    %v454 = vadd.f32 0.0, %v453
    %v455 = vpop.f32.mrb[0].mxu0
    %v456 = vpop.f32.mrb[0].mxu0
    %v457 = vpop.f32.mrb[0].mxu0
    %458 = vdwg.mxu0
    %v460 = vsel %vm136, %v103, 0
    %v463 = vsel %vm136, %v119, 0
    %465 = vmatprep.subr.bf16.mxu0 0
    %466 = vmatpush1.bf16.xpose.msra.mxu0 %v463
    %467 = vmatprep.subr.bf16.mxu0 0
    %468 = vmatpush1.bf16.xpose.msra.mxu0 0
    %469 = vmatprep.subr.bf16.mxu0 0
    %470 = vmatpush1.bf16.xpose.msra.mxu0 0
    %471 = vmatprep.subr.bf16.mxu0 0
    %472 = vmatpush1.bf16.xpose.msra.mxu0 0
    %473 = vmatprep.subr.bf16.mxu0 0
    %474 = vmatpush1.bf16.xpose.msra.mxu0 0
    %475 = vmatprep.subr.bf16.mxu0 0
    %476 = vmatpush1.bf16.xpose.msra.mxu0 0
    %477 = vmatprep.subr.bf16.mxu0 0
    %478 = vmatpush1.bf16.xpose.msra.mxu0 0
    %479 = vmatprep.subr.bf16.mxu0 0
    %480 = vmatpush1.bf16.xpose.msra.mxu0 0
    %481 = vmatprep.subr.bf16.mxu0 0
    %482 = vmatpush1.bf16.xpose.msra.mxu0 0
    %483 = vmatprep.subr.bf16.mxu0 0
    %484 = vmatpush1.bf16.xpose.msra.mxu0 0
    %485 = vmatprep.subr.bf16.mxu0 0
    %486 = vmatpush1.bf16.xpose.msra.mxu0 0
    %487 = vmatprep.subr.bf16.mxu0 0
    %488 = vmatpush1.bf16.xpose.msra.mxu0 0
    %489 = vmatprep.subr.bf16.mxu0 0
    %490 = vmatpush1.bf16.xpose.msra.mxu0 0
    %491 = vmatprep.subr.bf16.mxu0 0
    %492 = vmatpush1.bf16.xpose.msra.mxu0 0
    %493 = vmatprep.subr.bf16.mxu0 0
    %494 = vmatpush1.bf16.xpose.msra.mxu0 0
    %495 = vmatprep.subr.bf16.mxu0 0
    %496 = vmatpush1.bf16.xpose.msra.mxu0 0
    %497 = vmatprep.mubr.bf16.mxu0 0
    %498 = vmatmul.mubr.bf16.gmra.mrb[0].mxu0 %v460
    %v499 = vpop.f32.mrb[0].mxu0
    %v500 = vadd.f32 0.0, %v499
    %v501 = vpop.f32.mrb[0].mxu0
    %v502 = vpop.f32.mrb[0].mxu0
    %v503 = vpop.f32.mrb[0].mxu0
    %504 = vdwg.mxu0
    %v505 = vsel %vm136, %v178, -inf
    %506 = vmax.xlane.f32.xlu0 %v505
    %v507 = vpop.xlane.xlu0 %506
    %v508 = vsel %vm136, %v224, -inf
    %509 = vmax.xlane.f32.xlu0 %v508
    %v510 = vpop.xlane.xlu0 %509
    %v511 = vsel %vm136, %v270, -inf
    %512 = vmax.xlane.f32.xlu0 %v511
    %v513 = vpop.xlane.xlu0 %512
    %v514 = vsel %vm136, %v316, -inf
    %515 = vmax.xlane.f32.xlu0 %v514
    %v516 = vpop.xlane.xlu0 %515
    %v517 = vsel %vm136, %v362, -inf
    %518 = vmax.xlane.f32.xlu0 %v517
    %v519 = vpop.xlane.xlu0 %518
    %v520 = vsel %vm136, %v408, -inf
    %521 = vmax.xlane.f32.xlu0 %v520
    %v522 = vpop.xlane.xlu0 %521
    %v523 = vsel %vm136, %v454, -inf
    %524 = vmax.xlane.f32.xlu0 %v523
    %v525 = vpop.xlane.xlu0 %524
    %v526 = vsel %vm136, %v500, -inf
    %527 = vmax.xlane.f32.xlu0 %v526
    %v528 = vpop.xlane.xlu0 %527
    %v529 = vsub.f32 %v178, %v507
    %v530 = vsub.f32 %v224, %v510
    %v531 = vsub.f32 %v270, %v513
    %v532 = vsub.f32 %v316, %v516
    %v533 = vsub.f32 %v362, %v519
    %v534 = vsub.f32 %v408, %v522
    %v535 = vsub.f32 %v454, %v525
    %v536 = vsub.f32 %v500, %v528
    %v537 = vmul.f32 %v529, 1.442695
    %v538 = vpow.pop %v537
    %v539 = vmul.f32 %v530, 1.442695
    %v540 = vpow.pop %v539
    %v541 = vmul.f32 %v531, 1.442695
    %v542 = vpow.pop %v541
    %v543 = vmul.f32 %v532, 1.442695
    %v544 = vpow.pop %v543
    %v545 = vmul.f32 %v533, 1.442695
    %v546 = vpow.pop %v545
    %v547 = vmul.f32 %v534, 1.442695
    %v548 = vpow.pop %v547
    %v549 = vmul.f32 %v535, 1.442695
    %v550 = vpow.pop %v549
    %v551 = vmul.f32 %v536, 1.442695
    %v552 = vpow.pop %v551
    %v553 = vsel %vm136, %v538, 0.0
    %554 = vadd.xlane.f32.xlu0 %v553
    %v555 = vpop.xlane.xlu0 %554
    %v556 = vsel %vm136, %v540, 0.0
    %557 = vadd.xlane.f32.xlu0 %v556
    %v558 = vpop.xlane.xlu0 %557
    %v559 = vsel %vm136, %v542, 0.0
    %560 = vadd.xlane.f32.xlu0 %v559
    %v561 = vpop.xlane.xlu0 %560
    %v562 = vsel %vm136, %v544, 0.0
    %563 = vadd.xlane.f32.xlu0 %v562
    %v564 = vpop.xlane.xlu0 %563
    %v565 = vsel %vm136, %v546, 0.0
    %566 = vadd.xlane.f32.xlu0 %v565
    %v567 = vpop.xlane.xlu0 %566
    %v568 = vsel %vm136, %v548, 0.0
    %569 = vadd.xlane.f32.xlu0 %v568
    %v570 = vpop.xlane.xlu0 %569
    %v571 = vsel %vm136, %v550, 0.0
    %572 = vadd.xlane.f32.xlu0 %v571
    %v573 = vpop.xlane.xlu0 %572
    %v574 = vsel %vm136, %v552, 0.0
    %575 = vadd.xlane.f32.xlu0 %v574
    %v576 = vpop.xlane.xlu0 %575
    %v577 = vrcp.pop %v555
    %v578 = vrcp.pop %v558
    %v579 = vrcp.pop %v561
    %v580 = vrcp.pop %v564
    %v581 = vrcp.pop %v567
    %v582 = vrcp.pop %v570
    %v583 = vrcp.pop %v573
    %v584 = vrcp.pop %v576
    %v585 = vmul.f32 %v538, %v577
    %v586 = vmul.f32 %v540, %v578
    %v587 = vmul.f32 %v542, %v579
    %v588 = vmul.f32 %v544, %v580
    %v589 = vmul.f32 %v546, %v581
    %v590 = vmul.f32 %v548, %v582
    %v591 = vmul.f32 %v550, %v583
    %v592 = vmul.f32 %v552, %v584
    %593 = vst.msk [vmem:[#allocation11] sm:$0xff] %vm136, %v585
    %594 = vst.msk [vmem:[#allocation11 + $0x8] sm:$0xff] %vm136, %v586
    %595 = vst.msk [vmem:[#allocation11 + $0x10] sm:$0xff] %vm136, %v587
    %596 = vst.msk [vmem:[#allocation11 + $0x18] sm:$0xff] %vm136, %v588
    %597 = vst.msk [vmem:[#allocation11 + $0x20] sm:$0xff] %vm136, %v589
    %598 = vst.msk [vmem:[#allocation11 + $0x28] sm:$0xff] %vm136, %v590
    %599 = vst.msk [vmem:[#allocation11 + $0x30] sm:$0xff] %vm136, %v591
    %600 = vst.msk [vmem:[#allocation11 + $0x38] sm:$0xff] %vm136, %v592
    %v601 = vrcp.pop %v555
    %v602 = vrcp.pop %v558
    %v603 = vrcp.pop %v561
    %v604 = vrcp.pop %v564
    %v605 = vrcp.pop %v567
    %v606 = vrcp.pop %v570
    %v607 = vrcp.pop %v573
    %v608 = vrcp.pop %v576
    %v609 = vmul.f32 %v538, %v601
    %v610 = vmul.f32 %v540, %v602
    %v611 = vmul.f32 %v542, %v603
    %v612 = vmul.f32 %v544, %v604
    %v613 = vmul.f32 %v546, %v605
    %v614 = vmul.f32 %v548, %v606
    %v615 = vmul.f32 %v550, %v607
    %v616 = vmul.f32 %v552, %v608
    %v617 = vpack.c.bf16 %v609, %v609
    %v618 = vpack.c.bf16 %v610, %v610
    %v619 = vpack.c.bf16 %v611, %v611
    %v620 = vpack.c.bf16 %v612, %v612
    %v621 = vpack.c.bf16 %v613, %v613
    %v622 = vpack.c.bf16 %v614, %v614
    %v623 = vpack.c.bf16 %v615, %v615
    %v624 = vpack.c.bf16 %v616, %v616
    %v626 = vsel %vm136, %v617, 0
    %vm628 = vcmask 1043456
    %v630 = vsel %vm628, %v128, 0
    %632 = vmatprep.subr.bf16.mxu0 0
    %633 = vmatpush1.bf16.msra.mxu0 %v630
    %634 = vmatprep.subr.bf16.mxu0 0
    %635 = vmatpush1.bf16.msra.mxu0 0
    %636 = vmatprep.subr.bf16.mxu0 0
    %637 = vmatpush1.bf16.msra.mxu0 0
    %638 = vmatprep.subr.bf16.mxu0 0
    %639 = vmatpush1.bf16.msra.mxu0 0
    %640 = vmatprep.subr.bf16.mxu0 0
    %641 = vmatpush1.bf16.msra.mxu0 0
    %642 = vmatprep.subr.bf16.mxu0 0
    %643 = vmatpush1.bf16.msra.mxu0 0
    %644 = vmatprep.subr.bf16.mxu0 0
    %645 = vmatpush1.bf16.msra.mxu0 0
    %646 = vmatprep.subr.bf16.mxu0 0
    %647 = vmatpush1.bf16.msra.mxu0 0
    %648 = vmatprep.subr.bf16.mxu0 0
    %649 = vmatpush1.bf16.msra.mxu0 0
    %650 = vmatprep.subr.bf16.mxu0 0
    %651 = vmatpush1.bf16.msra.mxu0 0
    %652 = vmatprep.subr.bf16.mxu0 0
    %653 = vmatpush1.bf16.msra.mxu0 0
    %654 = vmatprep.subr.bf16.mxu0 0
    %655 = vmatpush1.bf16.msra.mxu0 0
    %656 = vmatprep.subr.bf16.mxu0 0
    %657 = vmatpush1.bf16.msra.mxu0 0
    %658 = vmatprep.subr.bf16.mxu0 0
    %659 = vmatpush1.bf16.msra.mxu0 0
    %660 = vmatprep.subr.bf16.mxu0 0
    %661 = vmatpush1.bf16.msra.mxu0 0
    %662 = vmatprep.subr.bf16.mxu0 0
    %663 = vmatpush1.bf16.msra.mxu0 0
    %664 = vmatprep.mubr.bf16.mxu0 0
    %665 = vmatmul.mubr.bf16.gmra.mrb[0].mxu0 %v626
    %v666 = vpop.f32.mrb[0].mxu0
    %v667 = vadd.f32 0.0, %v666
    %v668 = vpop.f32.mrb[0].mxu0
    %v669 = vpop.f32.mrb[0].mxu0
    %v670 = vpop.f32.mrb[0].mxu0
    %671 = vdwg.mxu0
    %v673 = vsel %vm136, %v618, 0
    %v676 = vsel %vm628, %v129, 0
    %678 = vmatprep.subr.bf16.mxu0 0
    %679 = vmatpush1.bf16.msra.mxu0 %v676
    %680 = vmatprep.subr.bf16.mxu0 0
    %681 = vmatpush1.bf16.msra.mxu0 0
    %682 = vmatprep.subr.bf16.mxu0 0
    %683 = vmatpush1.bf16.msra.mxu0 0
    %684 = vmatprep.subr.bf16.mxu0 0
    %685 = vmatpush1.bf16.msra.mxu0 0
    %686 = vmatprep.subr.bf16.mxu0 0
    %687 = vmatpush1.bf16.msra.mxu0 0
    %688 = vmatprep.subr.bf16.mxu0 0
    %689 = vmatpush1.bf16.msra.mxu0 0
    %690 = vmatprep.subr.bf16.mxu0 0
    %691 = vmatpush1.bf16.msra.mxu0 0
    %692 = vmatprep.subr.bf16.mxu0 0
    %693 = vmatpush1.bf16.msra.mxu0 0
    %694 = vmatprep.subr.bf16.mxu0 0
    %695 = vmatpush1.bf16.msra.mxu0 0
    %696 = vmatprep.subr.bf16.mxu0 0
    %697 = vmatpush1.bf16.msra.mxu0 0
    %698 = vmatprep.subr.bf16.mxu0 0
    %699 = vmatpush1.bf16.msra.mxu0 0
    %700 = vmatprep.subr.bf16.mxu0 0
    %701 = vmatpush1.bf16.msra.mxu0 0
    %702 = vmatprep.subr.bf16.mxu0 0
    %703 = vmatpush1.bf16.msra.mxu0 0
    %704 = vmatprep.subr.bf16.mxu0 0
    %705 = vmatpush1.bf16.msra.mxu0 0
    %706 = vmatprep.subr.bf16.mxu0 0
    %707 = vmatpush1.bf16.msra.mxu0 0
    %708 = vmatprep.subr.bf16.mxu0 0
    %709 = vmatpush1.bf16.msra.mxu0 0
    %710 = vmatprep.mubr.bf16.mxu0 0
    %711 = vmatmul.mubr.bf16.gmra.mrb[0].mxu0 %v673
    %v712 = vpop.f32.mrb[0].mxu0
    %v713 = vadd.f32 0.0, %v712
    %v714 = vpop.f32.mrb[0].mxu0
    %v715 = vpop.f32.mrb[0].mxu0
    %v716 = vpop.f32.mrb[0].mxu0
    %717 = vdwg.mxu0
    %v719 = vsel %vm136, %v619, 0
    %v722 = vsel %vm628, %v130, 0
    %724 = vmatprep.subr.bf16.mxu0 0
    %725 = vmatpush1.bf16.msra.mxu0 %v722
    %726 = vmatprep.subr.bf16.mxu0 0
    %727 = vmatpush1.bf16.msra.mxu0 0
    %728 = vmatprep.subr.bf16.mxu0 0
    %729 = vmatpush1.bf16.msra.mxu0 0
    %730 = vmatprep.subr.bf16.mxu0 0
    %731 = vmatpush1.bf16.msra.mxu0 0
    %732 = vmatprep.subr.bf16.mxu0 0
    %733 = vmatpush1.bf16.msra.mxu0 0
    %734 = vmatprep.subr.bf16.mxu0 0
    %735 = vmatpush1.bf16.msra.mxu0 0
    %736 = vmatprep.subr.bf16.mxu0 0
    %737 = vmatpush1.bf16.msra.mxu0 0
    %738 = vmatprep.subr.bf16.mxu0 0
    %739 = vmatpush1.bf16.msra.mxu0 0
    %740 = vmatprep.subr.bf16.mxu0 0
    %741 = vmatpush1.bf16.msra.mxu0 0
    %742 = vmatprep.subr.bf16.mxu0 0
    %743 = vmatpush1.bf16.msra.mxu0 0
    %744 = vmatprep.subr.bf16.mxu0 0
    %745 = vmatpush1.bf16.msra.mxu0 0
    %746 = vmatprep.subr.bf16.mxu0 0
    %747 = vmatpush1.bf16.msra.mxu0 0
    %748 = vmatprep.subr.bf16.mxu0 0
    %749 = vmatpush1.bf16.msra.mxu0 0
    %750 = vmatprep.subr.bf16.mxu0 0
    %751 = vmatpush1.bf16.msra.mxu0 0
    %752 = vmatprep.subr.bf16.mxu0 0
    %753 = vmatpush1.bf16.msra.mxu0 0
    %754 = vmatprep.subr.bf16.mxu0 0
    %755 = vmatpush1.bf16.msra.mxu0 0
    %756 = vmatprep.mubr.bf16.mxu0 0
    %757 = vmatmul.mubr.bf16.gmra.mrb[0].mxu0 %v719
    %v758 = vpop.f32.mrb[0].mxu0
    %v759 = vadd.f32 0.0, %v758
    %v760 = vpop.f32.mrb[0].mxu0
    %v761 = vpop.f32.mrb[0].mxu0
    %v762 = vpop.f32.mrb[0].mxu0
    %763 = vdwg.mxu0
    %v765 = vsel %vm136, %v620, 0
    %v768 = vsel %vm628, %v131, 0
    %770 = vmatprep.subr.bf16.mxu0 0
    %771 = vmatpush1.bf16.msra.mxu0 %v768
    %772 = vmatprep.subr.bf16.mxu0 0
    %773 = vmatpush1.bf16.msra.mxu0 0
    %774 = vmatprep.subr.bf16.mxu0 0
    %775 = vmatpush1.bf16.msra.mxu0 0
    %776 = vmatprep.subr.bf16.mxu0 0
    %777 = vmatpush1.bf16.msra.mxu0 0
    %778 = vmatprep.subr.bf16.mxu0 0
    %779 = vmatpush1.bf16.msra.mxu0 0
    %780 = vmatprep.subr.bf16.mxu0 0
    %781 = vmatpush1.bf16.msra.mxu0 0
    %782 = vmatprep.subr.bf16.mxu0 0
    %783 = vmatpush1.bf16.msra.mxu0 0
    %784 = vmatprep.subr.bf16.mxu0 0
    %785 = vmatpush1.bf16.msra.mxu0 0
    %786 = vmatprep.subr.bf16.mxu0 0
    %787 = vmatpush1.bf16.msra.mxu0 0
    %788 = vmatprep.subr.bf16.mxu0 0
    %789 = vmatpush1.bf16.msra.mxu0 0
    %790 = vmatprep.subr.bf16.mxu0 0
    %791 = vmatpush1.bf16.msra.mxu0 0
    %792 = vmatprep.subr.bf16.mxu0 0
    %793 = vmatpush1.bf16.msra.mxu0 0
    %794 = vmatprep.subr.bf16.mxu0 0
    %795 = vmatpush1.bf16.msra.mxu0 0
    %796 = vmatprep.subr.bf16.mxu0 0
    %797 = vmatpush1.bf16.msra.mxu0 0
    %798 = vmatprep.subr.bf16.mxu0 0
    %799 = vmatpush1.bf16.msra.mxu0 0
    %800 = vmatprep.subr.bf16.mxu0 0
    %801 = vmatpush1.bf16.msra.mxu0 0
    %802 = vmatprep.mubr.bf16.mxu0 0
    %803 = vmatmul.mubr.bf16.gmra.mrb[0].mxu0 %v765
    %v804 = vpop.f32.mrb[0].mxu0
    %v805 = vadd.f32 0.0, %v804
    %v806 = vpop.f32.mrb[0].mxu0
    %v807 = vpop.f32.mrb[0].mxu0
    %v808 = vpop.f32.mrb[0].mxu0
    %809 = vdwg.mxu0
    %v811 = vsel %vm136, %v621, 0
    %v814 = vsel %vm628, %v132, 0
    %816 = vmatprep.subr.bf16.mxu0 0
    %817 = vmatpush1.bf16.msra.mxu0 %v814
    %818 = vmatprep.subr.bf16.mxu0 0
    %819 = vmatpush1.bf16.msra.mxu0 0
    %820 = vmatprep.subr.bf16.mxu0 0
    %821 = vmatpush1.bf16.msra.mxu0 0
    %822 = vmatprep.subr.bf16.mxu0 0
    %823 = vmatpush1.bf16.msra.mxu0 0
    %824 = vmatprep.subr.bf16.mxu0 0
    %825 = vmatpush1.bf16.msra.mxu0 0
    %826 = vmatprep.subr.bf16.mxu0 0
    %827 = vmatpush1.bf16.msra.mxu0 0
    %828 = vmatprep.subr.bf16.mxu0 0
    %829 = vmatpush1.bf16.msra.mxu0 0
    %830 = vmatprep.subr.bf16.mxu0 0
    %831 = vmatpush1.bf16.msra.mxu0 0
    %832 = vmatprep.subr.bf16.mxu0 0
    %833 = vmatpush1.bf16.msra.mxu0 0
    %834 = vmatprep.subr.bf16.mxu0 0
    %835 = vmatpush1.bf16.msra.mxu0 0
    %836 = vmatprep.subr.bf16.mxu0 0
    %837 = vmatpush1.bf16.msra.mxu0 0
    %838 = vmatprep.subr.bf16.mxu0 0
    %839 = vmatpush1.bf16.msra.mxu0 0
    %840 = vmatprep.subr.bf16.mxu0 0
    %841 = vmatpush1.bf16.msra.mxu0 0
    %842 = vmatprep.subr.bf16.mxu0 0
    %843 = vmatpush1.bf16.msra.mxu0 0
    %844 = vmatprep.subr.bf16.mxu0 0
    %845 = vmatpush1.bf16.msra.mxu0 0
    %846 = vmatprep.subr.bf16.mxu0 0
    %847 = vmatpush1.bf16.msra.mxu0 0
    %848 = vmatprep.mubr.bf16.mxu0 0
    %849 = vmatmul.mubr.bf16.gmra.mrb[0].mxu0 %v811
    %v850 = vpop.f32.mrb[0].mxu0
    %v851 = vadd.f32 0.0, %v850
    %v852 = vpop.f32.mrb[0].mxu0
    %v853 = vpop.f32.mrb[0].mxu0
    %v854 = vpop.f32.mrb[0].mxu0
    %855 = vdwg.mxu0
    %v857 = vsel %vm136, %v622, 0
    %v860 = vsel %vm628, %v133, 0
    %862 = vmatprep.subr.bf16.mxu0 0
    %863 = vmatpush1.bf16.msra.mxu0 %v860
    %864 = vmatprep.subr.bf16.mxu0 0
    %865 = vmatpush1.bf16.msra.mxu0 0
    %866 = vmatprep.subr.bf16.mxu0 0
    %867 = vmatpush1.bf16.msra.mxu0 0
    %868 = vmatprep.subr.bf16.mxu0 0
    %869 = vmatpush1.bf16.msra.mxu0 0
    %870 = vmatprep.subr.bf16.mxu0 0
    %871 = vmatpush1.bf16.msra.mxu0 0
    %872 = vmatprep.subr.bf16.mxu0 0
    %873 = vmatpush1.bf16.msra.mxu0 0
    %874 = vmatprep.subr.bf16.mxu0 0
    %875 = vmatpush1.bf16.msra.mxu0 0
    %876 = vmatprep.subr.bf16.mxu0 0
    %877 = vmatpush1.bf16.msra.mxu0 0
    %878 = vmatprep.subr.bf16.mxu0 0
    %879 = vmatpush1.bf16.msra.mxu0 0
    %880 = vmatprep.subr.bf16.mxu0 0
    %881 = vmatpush1.bf16.msra.mxu0 0
    %882 = vmatprep.subr.bf16.mxu0 0
    %883 = vmatpush1.bf16.msra.mxu0 0
    %884 = vmatprep.subr.bf16.mxu0 0
    %885 = vmatpush1.bf16.msra.mxu0 0
    %886 = vmatprep.subr.bf16.mxu0 0
    %887 = vmatpush1.bf16.msra.mxu0 0
    %888 = vmatprep.subr.bf16.mxu0 0
    %889 = vmatpush1.bf16.msra.mxu0 0
    %890 = vmatprep.subr.bf16.mxu0 0
    %891 = vmatpush1.bf16.msra.mxu0 0
    %892 = vmatprep.subr.bf16.mxu0 0
    %893 = vmatpush1.bf16.msra.mxu0 0
    %894 = vmatprep.mubr.bf16.mxu0 0
    %895 = vmatmul.mubr.bf16.gmra.mrb[0].mxu0 %v857
    %v896 = vpop.f32.mrb[0].mxu0
    %v897 = vadd.f32 0.0, %v896
    %v898 = vpop.f32.mrb[0].mxu0
    %v899 = vpop.f32.mrb[0].mxu0
    %v900 = vpop.f32.mrb[0].mxu0
    %901 = vdwg.mxu0
    %v903 = vsel %vm136, %v623, 0
    %v906 = vsel %vm628, %v134, 0
    %908 = vmatprep.subr.bf16.mxu0 0
    %909 = vmatpush1.bf16.msra.mxu0 %v906
    %910 = vmatprep.subr.bf16.mxu0 0
    %911 = vmatpush1.bf16.msra.mxu0 0
    %912 = vmatprep.subr.bf16.mxu0 0
    %913 = vmatpush1.bf16.msra.mxu0 0
    %914 = vmatprep.subr.bf16.mxu0 0
    %915 = vmatpush1.bf16.msra.mxu0 0
    %916 = vmatprep.subr.bf16.mxu0 0
    %917 = vmatpush1.bf16.msra.mxu0 0
    %918 = vmatprep.subr.bf16.mxu0 0
    %919 = vmatpush1.bf16.msra.mxu0 0
    %920 = vmatprep.subr.bf16.mxu0 0
    %921 = vmatpush1.bf16.msra.mxu0 0
    %922 = vmatprep.subr.bf16.mxu0 0
    %923 = vmatpush1.bf16.msra.mxu0 0
    %924 = vmatprep.subr.bf16.mxu0 0
    %925 = vmatpush1.bf16.msra.mxu0 0
    %926 = vmatprep.subr.bf16.mxu0 0
    %927 = vmatpush1.bf16.msra.mxu0 0
    %928 = vmatprep.subr.bf16.mxu0 0
    %929 = vmatpush1.bf16.msra.mxu0 0
    %930 = vmatprep.subr.bf16.mxu0 0
    %931 = vmatpush1.bf16.msra.mxu0 0
    %932 = vmatprep.subr.bf16.mxu0 0
    %933 = vmatpush1.bf16.msra.mxu0 0
    %934 = vmatprep.subr.bf16.mxu0 0
    %935 = vmatpush1.bf16.msra.mxu0 0
    %936 = vmatprep.subr.bf16.mxu0 0
    %937 = vmatpush1.bf16.msra.mxu0 0
    %938 = vmatprep.subr.bf16.mxu0 0
    %939 = vmatpush1.bf16.msra.mxu0 0
    %940 = vmatprep.mubr.bf16.mxu0 0
    %941 = vmatmul.mubr.bf16.gmra.mrb[0].mxu0 %v903
    %v942 = vpop.f32.mrb[0].mxu0
    %v943 = vadd.f32 0.0, %v942
    %v944 = vpop.f32.mrb[0].mxu0
    %v945 = vpop.f32.mrb[0].mxu0
    %v946 = vpop.f32.mrb[0].mxu0
    %947 = vdwg.mxu0
    %v949 = vsel %vm136, %v624, 0
    %v952 = vsel %vm628, %v135, 0
    %954 = vmatprep.subr.bf16.mxu0 0
    %955 = vmatpush1.bf16.msra.mxu0 %v952
    %956 = vmatprep.subr.bf16.mxu0 0
    %957 = vmatpush1.bf16.msra.mxu0 0
    %958 = vmatprep.subr.bf16.mxu0 0
    %959 = vmatpush1.bf16.msra.mxu0 0
    %960 = vmatprep.subr.bf16.mxu0 0
    %961 = vmatpush1.bf16.msra.mxu0 0
    %962 = vmatprep.subr.bf16.mxu0 0
    %963 = vmatpush1.bf16.msra.mxu0 0
    %964 = vmatprep.subr.bf16.mxu0 0
    %965 = vmatpush1.bf16.msra.mxu0 0
    %966 = vmatprep.subr.bf16.mxu0 0
    %967 = vmatpush1.bf16.msra.mxu0 0
    %968 = vmatprep.subr.bf16.mxu0 0
    %969 = vmatpush1.bf16.msra.mxu0 0
    %970 = vmatprep.subr.bf16.mxu0 0
    %971 = vmatpush1.bf16.msra.mxu0 0
    %972 = vmatprep.subr.bf16.mxu0 0
    %973 = vmatpush1.bf16.msra.mxu0 0
    %974 = vmatprep.subr.bf16.mxu0 0
    %975 = vmatpush1.bf16.msra.mxu0 0
    %976 = vmatprep.subr.bf16.mxu0 0
    %977 = vmatpush1.bf16.msra.mxu0 0
    %978 = vmatprep.subr.bf16.mxu0 0
    %979 = vmatpush1.bf16.msra.mxu0 0
    %980 = vmatprep.subr.bf16.mxu0 0
    %981 = vmatpush1.bf16.msra.mxu0 0
    %982 = vmatprep.subr.bf16.mxu0 0
    %983 = vmatpush1.bf16.msra.mxu0 0
    %984 = vmatprep.subr.bf16.mxu0 0
    %985 = vmatpush1.bf16.msra.mxu0 0
    %986 = vmatprep.mubr.bf16.mxu0 0
    %987 = vmatmul.mubr.bf16.gmra.mrb[0].mxu0 %v949
    %v988 = vpop.f32.mrb[0].mxu0
    %v989 = vadd.f32 0.0, %v988
    %v990 = vpop.f32.mrb[0].mxu0
    %v991 = vpop.f32.mrb[0].mxu0
    %v992 = vpop.f32.mrb[0].mxu0
    %993 = vdwg.mxu0
    %v994 = vld [vmem:[#allocation8] sm:$0xff]
    %v995 = vld [vmem:[#allocation8 + $0x8] sm:$0xff]
    %v996 = vld [vmem:[#allocation8 + $0x10] sm:$0xff]
    %v997 = vld [vmem:[#allocation8 + $0x18] sm:$0xff]
    %v998 = vpack.c.bf16 %v994, %v994
    %v999 = vpack.c.bf16 %v995, %v995
    %v1000 = vpack.c.bf16 %v996, %v996
    %v1001 = vpack.c.bf16 %v997, %v997
    %v1002 = vld [vmem:[%s4] sm:$0x1]
    %v1003 = vpack.c.bf16 %v667, %v667
    %v1004 = vpack.c.bf16 %v713, %v713
    %v1005 = vpack.c.bf16 %v759, %v759
    %v1006 = vpack.c.bf16 %v805, %v805
    %v1008 = vsel %vm136, %v1003, 0
    %v1011 = vsel %vm628, %v998, 0
    %1013 = vmatprep.subr.bf16.mxu0 0
    %1014 = vmatpush1.bf16.msra.mxu0 %v1011
    %1015 = vmatprep.subr.bf16.mxu0 0
    %1016 = vmatpush1.bf16.msra.mxu0 0
    %1017 = vmatprep.subr.bf16.mxu0 0
    %1018 = vmatpush1.bf16.msra.mxu0 0
    %1019 = vmatprep.subr.bf16.mxu0 0
    %1020 = vmatpush1.bf16.msra.mxu0 0
    %1021 = vmatprep.subr.bf16.mxu0 0
    %1022 = vmatpush1.bf16.msra.mxu0 0
    %1023 = vmatprep.subr.bf16.mxu0 0
    %1024 = vmatpush1.bf16.msra.mxu0 0
    %1025 = vmatprep.subr.bf16.mxu0 0
    %1026 = vmatpush1.bf16.msra.mxu0 0
    %1027 = vmatprep.subr.bf16.mxu0 0
    %1028 = vmatpush1.bf16.msra.mxu0 0
    %1029 = vmatprep.subr.bf16.mxu0 0
    %1030 = vmatpush1.bf16.msra.mxu0 0
    %1031 = vmatprep.subr.bf16.mxu0 0
    %1032 = vmatpush1.bf16.msra.mxu0 0
    %1033 = vmatprep.subr.bf16.mxu0 0
    %1034 = vmatpush1.bf16.msra.mxu0 0
    %1035 = vmatprep.subr.bf16.mxu0 0
    %1036 = vmatpush1.bf16.msra.mxu0 0
    %1037 = vmatprep.subr.bf16.mxu0 0
    %1038 = vmatpush1.bf16.msra.mxu0 0
    %1039 = vmatprep.subr.bf16.mxu0 0
    %1040 = vmatpush1.bf16.msra.mxu0 0
    %1041 = vmatprep.subr.bf16.mxu0 0
    %1042 = vmatpush1.bf16.msra.mxu0 0
    %1043 = vmatprep.subr.bf16.mxu0 0
    %1044 = vmatpush1.bf16.msra.mxu0 0
    %1045 = vmatprep.mubr.bf16.mxu0 0
    %1046 = vmatmul.mubr.bf16.gmra.mrb[0].mxu0 %v1008
    %v1047 = vpop.f32.mrb[0].mxu0
    %v1048 = vadd.f32 0.0, %v1047
    %v1049 = vpop.f32.mrb[0].mxu0
    %v1050 = vpop.f32.mrb[0].mxu0
    %v1051 = vpop.f32.mrb[0].mxu0
    %1052 = vdwg.mxu0
    %v1054 = vsel %vm136, %v1004, 0
    %v1057 = vsel %vm628, %v999, 0
    %1059 = vmatprep.subr.bf16.mxu0 0
    %1060 = vmatpush1.bf16.msra.mxu0 %v1057
    %1061 = vmatprep.subr.bf16.mxu0 0
    %1062 = vmatpush1.bf16.msra.mxu0 0
    %1063 = vmatprep.subr.bf16.mxu0 0
    %1064 = vmatpush1.bf16.msra.mxu0 0
    %1065 = vmatprep.subr.bf16.mxu0 0
    %1066 = vmatpush1.bf16.msra.mxu0 0
    %1067 = vmatprep.subr.bf16.mxu0 0
    %1068 = vmatpush1.bf16.msra.mxu0 0
    %1069 = vmatprep.subr.bf16.mxu0 0
    %1070 = vmatpush1.bf16.msra.mxu0 0
    %1071 = vmatprep.subr.bf16.mxu0 0
    %1072 = vmatpush1.bf16.msra.mxu0 0
    %1073 = vmatprep.subr.bf16.mxu0 0
    %1074 = vmatpush1.bf16.msra.mxu0 0
    %1075 = vmatprep.subr.bf16.mxu0 0
    %1076 = vmatpush1.bf16.msra.mxu0 0
    %1077 = vmatprep.subr.bf16.mxu0 0
    %1078 = vmatpush1.bf16.msra.mxu0 0
    %1079 = vmatprep.subr.bf16.mxu0 0
    %1080 = vmatpush1.bf16.msra.mxu0 0
    %1081 = vmatprep.subr.bf16.mxu0 0
    %1082 = vmatpush1.bf16.msra.mxu0 0
    %1083 = vmatprep.subr.bf16.mxu0 0
    %1084 = vmatpush1.bf16.msra.mxu0 0
    %1085 = vmatprep.subr.bf16.mxu0 0
    %1086 = vmatpush1.bf16.msra.mxu0 0
    %1087 = vmatprep.subr.bf16.mxu0 0
    %1088 = vmatpush1.bf16.msra.mxu0 0
    %1089 = vmatprep.subr.bf16.mxu0 0
    %1090 = vmatpush1.bf16.msra.mxu0 0
    %1091 = vmatprep.mubr.bf16.mxu0 0
    %1092 = vmatmul.mubr.bf16.gmra.mrb[0].mxu0 %v1054
    %v1093 = vpop.f32.mrb[0].mxu0
    %v1094 = vadd.f32 0.0, %v1093
    %v1095 = vpop.f32.mrb[0].mxu0
    %v1096 = vpop.f32.mrb[0].mxu0
    %v1097 = vpop.f32.mrb[0].mxu0
    %1098 = vdwg.mxu0
    %v1100 = vsel %vm136, %v1005, 0
    %v1103 = vsel %vm628, %v1000, 0
    %1105 = vmatprep.subr.bf16.mxu0 0
    %1106 = vmatpush1.bf16.msra.mxu0 %v1103
    %1107 = vmatprep.subr.bf16.mxu0 0
    %1108 = vmatpush1.bf16.msra.mxu0 0
    %1109 = vmatprep.subr.bf16.mxu0 0
    %1110 = vmatpush1.bf16.msra.mxu0 0
    %1111 = vmatprep.subr.bf16.mxu0 0
    %1112 = vmatpush1.bf16.msra.mxu0 0
    %1113 = vmatprep.subr.bf16.mxu0 0
    %1114 = vmatpush1.bf16.msra.mxu0 0
    %1115 = vmatprep.subr.bf16.mxu0 0
    %1116 = vmatpush1.bf16.msra.mxu0 0
    %1117 = vmatprep.subr.bf16.mxu0 0
    %1118 = vmatpush1.bf16.msra.mxu0 0
    %1119 = vmatprep.subr.bf16.mxu0 0
    %1120 = vmatpush1.bf16.msra.mxu0 0
    %1121 = vmatprep.subr.bf16.mxu0 0
    %1122 = vmatpush1.bf16.msra.mxu0 0
    %1123 = vmatprep.subr.bf16.mxu0 0
    %1124 = vmatpush1.bf16.msra.mxu0 0
    %1125 = vmatprep.subr.bf16.mxu0 0
    %1126 = vmatpush1.bf16.msra.mxu0 0
    %1127 = vmatprep.subr.bf16.mxu0 0
    %1128 = vmatpush1.bf16.msra.mxu0 0
    %1129 = vmatprep.subr.bf16.mxu0 0
    %1130 = vmatpush1.bf16.msra.mxu0 0
    %1131 = vmatprep.subr.bf16.mxu0 0
    %1132 = vmatpush1.bf16.msra.mxu0 0
    %1133 = vmatprep.subr.bf16.mxu0 0
    %1134 = vmatpush1.bf16.msra.mxu0 0
    %1135 = vmatprep.subr.bf16.mxu0 0
    %1136 = vmatpush1.bf16.msra.mxu0 0
    %1137 = vmatprep.mubr.bf16.mxu0 0
    %1138 = vmatmul.mubr.bf16.gmra.mrb[0].mxu0 %v1100
    %v1139 = vpop.f32.mrb[0].mxu0
    %v1140 = vadd.f32 0.0, %v1139
    %v1141 = vpop.f32.mrb[0].mxu0
    %v1142 = vpop.f32.mrb[0].mxu0
    %v1143 = vpop.f32.mrb[0].mxu0
    %1144 = vdwg.mxu0
    %v1146 = vsel %vm136, %v1006, 0
    %v1149 = vsel %vm628, %v1001, 0
    %1151 = vmatprep.subr.bf16.mxu0 0
    %1152 = vmatpush1.bf16.msra.mxu0 %v1149
    %1153 = vmatprep.subr.bf16.mxu0 0
    %1154 = vmatpush1.bf16.msra.mxu0 0
    %1155 = vmatprep.subr.bf16.mxu0 0
    %1156 = vmatpush1.bf16.msra.mxu0 0
    %1157 = vmatprep.subr.bf16.mxu0 0
    %1158 = vmatpush1.bf16.msra.mxu0 0
    %1159 = vmatprep.subr.bf16.mxu0 0
    %1160 = vmatpush1.bf16.msra.mxu0 0
    %1161 = vmatprep.subr.bf16.mxu0 0
    %1162 = vmatpush1.bf16.msra.mxu0 0
    %1163 = vmatprep.subr.bf16.mxu0 0
    %1164 = vmatpush1.bf16.msra.mxu0 0
    %1165 = vmatprep.subr.bf16.mxu0 0
    %1166 = vmatpush1.bf16.msra.mxu0 0
    %1167 = vmatprep.subr.bf16.mxu0 0
    %1168 = vmatpush1.bf16.msra.mxu0 0
    %1169 = vmatprep.subr.bf16.mxu0 0
    %1170 = vmatpush1.bf16.msra.mxu0 0
    %1171 = vmatprep.subr.bf16.mxu0 0
    %1172 = vmatpush1.bf16.msra.mxu0 0
    %1173 = vmatprep.subr.bf16.mxu0 0
    %1174 = vmatpush1.bf16.msra.mxu0 0
    %1175 = vmatprep.subr.bf16.mxu0 0
    %1176 = vmatpush1.bf16.msra.mxu0 0
    %1177 = vmatprep.subr.bf16.mxu0 0
    %1178 = vmatpush1.bf16.msra.mxu0 0
    %1179 = vmatprep.subr.bf16.mxu0 0
    %1180 = vmatpush1.bf16.msra.mxu0 0
    %1181 = vmatprep.subr.bf16.mxu0 0
    %1182 = vmatpush1.bf16.msra.mxu0 0
    %1183 = vmatprep.mubr.bf16.mxu0 0
    %1184 = vmatmul.mubr.bf16.gmra.mrb[0].mxu0 %v1146
    %v1185 = vpop.f32.mrb[0].mxu0
    %v1186 = vadd.f32 0.0, %v1185
    %v1187 = vpop.f32.mrb[0].mxu0
    %v1188 = vpop.f32.mrb[0].mxu0
    %v1189 = vpop.f32.mrb[0].mxu0
    %1190 = vdwg.mxu0
    %vm1191 = vcmask 261120
    %v1192 = vsel %vm1191, %v1048, 0.0
    %v1193 = vsel %vm1191, %v1094, 0.0
    %v1194 = vadd.f32 %v1192, %v1193
    %v1195 = vsel %vm1191, %v1140, 0.0
    %v1196 = vadd.f32 %v1194, %v1195
    %v1197 = vsel %vm1191, %v1186, 0.0
    %v1198 = vadd.f32 %v1196, %v1197
    %v1200 = vlaneseq
    %v1201 = vshrl.u32 %v1200, 7
    %v1202 = vsub.s32 0, %v1201
    %v1203 = vrot.slane %v1002, %v1202
    %v1205 = vadd.f32 %v1198, %v1203
    %1206 = vst.msk [vmem:[#allocation10] sm:$0xff] %vm1191, %v1205
    %v1207 = vpack.c.bf16 %v851, %v851
    %v1208 = vpack.c.bf16 %v897, %v897
    %v1209 = vpack.c.bf16 %v943, %v943
    %v1210 = vpack.c.bf16 %v989, %v989
    %v1212 = vsel %vm136, %v1207, 0
    %1214 = vmatprep.subr.bf16.mxu0 0
    %1215 = vmatpush1.bf16.msra.mxu0 %v1011
    %1216 = vmatprep.subr.bf16.mxu0 0
    %1217 = vmatpush1.bf16.msra.mxu0 0
    %1218 = vmatprep.subr.bf16.mxu0 0
    %1219 = vmatpush1.bf16.msra.mxu0 0
    %1220 = vmatprep.subr.bf16.mxu0 0
    %1221 = vmatpush1.bf16.msra.mxu0 0
    %1222 = vmatprep.subr.bf16.mxu0 0
    %1223 = vmatpush1.bf16.msra.mxu0 0
    %1224 = vmatprep.subr.bf16.mxu0 0
    %1225 = vmatpush1.bf16.msra.mxu0 0
    %1226 = vmatprep.subr.bf16.mxu0 0
    %1227 = vmatpush1.bf16.msra.mxu0 0
    %1228 = vmatprep.subr.bf16.mxu0 0
    %1229 = vmatpush1.bf16.msra.mxu0 0
    %1230 = vmatprep.subr.bf16.mxu0 0
    %1231 = vmatpush1.bf16.msra.mxu0 0
    %1232 = vmatprep.subr.bf16.mxu0 0
    %1233 = vmatpush1.bf16.msra.mxu0 0
    %1234 = vmatprep.subr.bf16.mxu0 0
    %1235 = vmatpush1.bf16.msra.mxu0 0
    %1236 = vmatprep.subr.bf16.mxu0 0
    %1237 = vmatpush1.bf16.msra.mxu0 0
    %1238 = vmatprep.subr.bf16.mxu0 0
    %1239 = vmatpush1.bf16.msra.mxu0 0
    %1240 = vmatprep.subr.bf16.mxu0 0
    %1241 = vmatpush1.bf16.msra.mxu0 0
    %1242 = vmatprep.subr.bf16.mxu0 0
    %1243 = vmatpush1.bf16.msra.mxu0 0
    %1244 = vmatprep.subr.bf16.mxu0 0
    %1245 = vmatpush1.bf16.msra.mxu0 0
    %1246 = vmatprep.mubr.bf16.mxu0 0
    %1247 = vmatmul.mubr.bf16.gmra.mrb[0].mxu0 %v1212
    %v1248 = vpop.f32.mrb[0].mxu0
    %v1249 = vadd.f32 0.0, %v1248
    %v1250 = vpop.f32.mrb[0].mxu0
    %v1251 = vpop.f32.mrb[0].mxu0
    %v1252 = vpop.f32.mrb[0].mxu0
    %1253 = vdwg.mxu0
    %v1255 = vsel %vm136, %v1208, 0
    %1257 = vmatprep.subr.bf16.mxu0 0
    %1258 = vmatpush1.bf16.msra.mxu0 %v1057
    %1259 = vmatprep.subr.bf16.mxu0 0
    %1260 = vmatpush1.bf16.msra.mxu0 0
    %1261 = vmatprep.subr.bf16.mxu0 0
    %1262 = vmatpush1.bf16.msra.mxu0 0
    %1263 = vmatprep.subr.bf16.mxu0 0
    %1264 = vmatpush1.bf16.msra.mxu0 0
    %1265 = vmatprep.subr.bf16.mxu0 0
    %1266 = vmatpush1.bf16.msra.mxu0 0
    %1267 = vmatprep.subr.bf16.mxu0 0
    %1268 = vmatpush1.bf16.msra.mxu0 0
    %1269 = vmatprep.subr.bf16.mxu0 0
    %1270 = vmatpush1.bf16.msra.mxu0 0
    %1271 = vmatprep.subr.bf16.mxu0 0
    %1272 = vmatpush1.bf16.msra.mxu0 0
    %1273 = vmatprep.subr.bf16.mxu0 0
    %1274 = vmatpush1.bf16.msra.mxu0 0
    %1275 = vmatprep.subr.bf16.mxu0 0
    %1276 = vmatpush1.bf16.msra.mxu0 0
    %1277 = vmatprep.subr.bf16.mxu0 0
    %1278 = vmatpush1.bf16.msra.mxu0 0
    %1279 = vmatprep.subr.bf16.mxu0 0
    %1280 = vmatpush1.bf16.msra.mxu0 0
    %1281 = vmatprep.subr.bf16.mxu0 0
    %1282 = vmatpush1.bf16.msra.mxu0 0
    %1283 = vmatprep.subr.bf16.mxu0 0
    %1284 = vmatpush1.bf16.msra.mxu0 0
    %1285 = vmatprep.subr.bf16.mxu0 0
    %1286 = vmatpush1.bf16.msra.mxu0 0
    %1287 = vmatprep.subr.bf16.mxu0 0
    %1288 = vmatpush1.bf16.msra.mxu0 0
    %1289 = vmatprep.mubr.bf16.mxu0 0
    %1290 = vmatmul.mubr.bf16.gmra.mrb[0].mxu0 %v1255
    %v1291 = vpop.f32.mrb[0].mxu0
    %v1292 = vadd.f32 0.0, %v1291
    %v1293 = vpop.f32.mrb[0].mxu0
    %v1294 = vpop.f32.mrb[0].mxu0
    %v1295 = vpop.f32.mrb[0].mxu0
    %1296 = vdwg.mxu0
    %v1298 = vsel %vm136, %v1209, 0
    %1300 = vmatprep.subr.bf16.mxu0 0
    %1301 = vmatpush1.bf16.msra.mxu0 %v1103
    %1302 = vmatprep.subr.bf16.mxu0 0
    %1303 = vmatpush1.bf16.msra.mxu0 0
    %1304 = vmatprep.subr.bf16.mxu0 0
    %1305 = vmatpush1.bf16.msra.mxu0 0
    %1306 = vmatprep.subr.bf16.mxu0 0
    %1307 = vmatpush1.bf16.msra.mxu0 0
    %1308 = vmatprep.subr.bf16.mxu0 0
    %1309 = vmatpush1.bf16.msra.mxu0 0
    %1310 = vmatprep.subr.bf16.mxu0 0
    %1311 = vmatpush1.bf16.msra.mxu0 0
    %1312 = vmatprep.subr.bf16.mxu0 0
    %1313 = vmatpush1.bf16.msra.mxu0 0
    %1314 = vmatprep.subr.bf16.mxu0 0
    %1315 = vmatpush1.bf16.msra.mxu0 0
    %1316 = vmatprep.subr.bf16.mxu0 0
    %1317 = vmatpush1.bf16.msra.mxu0 0
    %1318 = vmatprep.subr.bf16.mxu0 0
    %1319 = vmatpush1.bf16.msra.mxu0 0
    %1320 = vmatprep.subr.bf16.mxu0 0
    %1321 = vmatpush1.bf16.msra.mxu0 0
    %1322 = vmatprep.subr.bf16.mxu0 0
    %1323 = vmatpush1.bf16.msra.mxu0 0
    %1324 = vmatprep.subr.bf16.mxu0 0
    %1325 = vmatpush1.bf16.msra.mxu0 0
    %1326 = vmatprep.subr.bf16.mxu0 0
    %1327 = vmatpush1.bf16.msra.mxu0 0
    %1328 = vmatprep.subr.bf16.mxu0 0
    %1329 = vmatpush1.bf16.msra.mxu0 0
    %1330 = vmatprep.subr.bf16.mxu0 0
    %1331 = vmatpush1.bf16.msra.mxu0 0
    %1332 = vmatprep.mubr.bf16.mxu0 0
    %1333 = vmatmul.mubr.bf16.gmra.mrb[0].mxu0 %v1298
    %v1334 = vpop.f32.mrb[0].mxu0
    %v1335 = vadd.f32 0.0, %v1334
    %v1336 = vpop.f32.mrb[0].mxu0
    %v1337 = vpop.f32.mrb[0].mxu0
    %v1338 = vpop.f32.mrb[0].mxu0
    %1339 = vdwg.mxu0
    %v1341 = vsel %vm136, %v1210, 0
    %1343 = vmatprep.subr.bf16.mxu0 0
    %1344 = vmatpush1.bf16.msra.mxu0 %v1149
    %1345 = vmatprep.subr.bf16.mxu0 0
    %1346 = vmatpush1.bf16.msra.mxu0 0
    %1347 = vmatprep.subr.bf16.mxu0 0
    %1348 = vmatpush1.bf16.msra.mxu0 0
    %1349 = vmatprep.subr.bf16.mxu0 0
    %1350 = vmatpush1.bf16.msra.mxu0 0
    %1351 = vmatprep.subr.bf16.mxu0 0
    %1352 = vmatpush1.bf16.msra.mxu0 0
    %1353 = vmatprep.subr.bf16.mxu0 0
    %1354 = vmatpush1.bf16.msra.mxu0 0
    %1355 = vmatprep.subr.bf16.mxu0 0
    %1356 = vmatpush1.bf16.msra.mxu0 0
    %1357 = vmatprep.subr.bf16.mxu0 0
    %1358 = vmatpush1.bf16.msra.mxu0 0
    %1359 = vmatprep.subr.bf16.mxu0 0
    %1360 = vmatpush1.bf16.msra.mxu0 0
    %1361 = vmatprep.subr.bf16.mxu0 0
    %1362 = vmatpush1.bf16.msra.mxu0 0
    %1363 = vmatprep.subr.bf16.mxu0 0
    %1364 = vmatpush1.bf16.msra.mxu0 0
    %1365 = vmatprep.subr.bf16.mxu0 0
    %1366 = vmatpush1.bf16.msra.mxu0 0
    %1367 = vmatprep.subr.bf16.mxu0 0
    %1368 = vmatpush1.bf16.msra.mxu0 0
    %1369 = vmatprep.subr.bf16.mxu0 0
    %1370 = vmatpush1.bf16.msra.mxu0 0
    %1371 = vmatprep.subr.bf16.mxu0 0
    %1372 = vmatpush1.bf16.msra.mxu0 0
    %1373 = vmatprep.subr.bf16.mxu0 0
    %1374 = vmatpush1.bf16.msra.mxu0 0
    %1375 = vmatprep.mubr.bf16.mxu0 0
    %1376 = vmatmul.mubr.bf16.gmra.mrb[0].mxu0 %v1341
    %v1377 = vpop.f32.mrb[0].mxu0
    %v1378 = vadd.f32 0.0, %v1377
    %v1379 = vpop.f32.mrb[0].mxu0
    %v1380 = vpop.f32.mrb[0].mxu0
    %v1381 = vpop.f32.mrb[0].mxu0
    %1382 = vdwg.mxu0
    %v1383 = vsel %vm1191, %v1249, 0.0
    %v1384 = vsel %vm1191, %v1292, 0.0
    %v1385 = vadd.f32 %v1383, %v1384
    %v1386 = vsel %vm1191, %v1335, 0.0
    %v1387 = vadd.f32 %v1385, %v1386
    %v1388 = vsel %vm1191, %v1378, 0.0
    %v1389 = vadd.f32 %v1387, %v1388
    %v1390 = vadd.f32 %v1389, %v1203
    %s1391 = scalar_lea.vmem [#allocation10], 8
    %1392 = vst.msk [vmem:[%s1391] sm:$0xff] %vm1191, %v1390
    // Predicated region
    $region38: #{tpu_custom_call.1} parent=1 // pred_check
      _
    $region39: #{tpu_custom_call.1} parent=1 // pred_check_branch
      %1394 = sbr.rel (0) target = $region41
    $region40: #{tpu_custom_call.1} parent=1 // pred_region
      %s1396 = ssub.s32 256, 256
      %1397 = vsyncadd [#allocation4], %s1396
      %s1398 = sshll.u32 [#allocation10], 4
      %s1399 = int_to_ptr.vmem [resolvable:$true] %s1398
      %1404 = dma.vmem_to_hbm [thread:$0]  %s1399, 256, %s5, [#allocation4], 128, 128, 8
    $region41: #{tpu_custom_call.1} parent=1 // pred_fallthru
      _
    // Predicated region
    $region42: #{tpu_custom_call.1} parent=1 // pred_check
      _
    $region43: #{tpu_custom_call.1} parent=1 // pred_check_branch
      %1406 = sbr.rel (0) target = $region45
    $region44: #{tpu_custom_call.1} parent=1 // pred_region
      %s1408 = ssub.s32 1024, 1024
      %1409 = vsyncadd [#allocation12], %s1408
      %s1410 = sshll.u32 [#allocation11], 4
      %s1411 = int_to_ptr.vmem [resolvable:$true] %s1410
      %1416 = dma.vmem_to_hbm [thread:$0]  %s1411, 1024, %s6, [#allocation12], 128, 128, 8
    $region45: #{tpu_custom_call.1} parent=1 // pred_fallthru
      _
    // Predicated region
    $region46: #{tpu_custom_call.1} parent=1 // pred_check
      _
    $region47: #{tpu_custom_call.1} parent=1 // pred_check_branch
      %1418 = sbr.rel (0) target = $region49
    $region48: #{tpu_custom_call.1} parent=1 // pred_region
      %1419 = dma.done [#allocation4], 256
    $region49: #{tpu_custom_call.1} parent=1 // pred_fallthru
      _
    // Predicated region
    $region50: #{tpu_custom_call.1} parent=1 // pred_check
      _
    $region51: #{tpu_custom_call.1} parent=1 // pred_check_branch
      %1421 = sbr.rel (0) target = $region53
    $region52: #{tpu_custom_call.1} parent=1 // pred_region
      %1422 = dma.done [#allocation12], 1024
    $region53: #{tpu_custom_call.1} parent=1 // pred_fallthru
      _
    %1423 = vsyncpa [#allocation3], 1
    %1424 = vsyncpa [#allocation6], 1
    %1425 = vsyncpa [#allocation9], 1
    %1426 = vsyncpa [#allocation4], 1
    %1427 = vsyncpa [#allocation12], 1

</llo_original>
